<compile_context>
chip_gen: v7x
topology: tpu7x:2x2x1
jax: 0.10.0
libtpu: 0.0.40
codegen_flags: <defaults>
</compile_context>

<pallas_src>
import functools
import math

import jax
import jax.numpy as jnp
from jax.experimental import pallas as pl
from jax.experimental.pallas import tpu as pltpu


def _round_up(x, m):
    return ((x + m - 1) // m) * m


def _layernorm_store(y, gamma_ref, beta_ref, o_ref, ln_eps):
    # One-pass stats (single XLU reduction pair); clamp variance against
    # catastrophic cancellation before rsqrt.
    mu = jnp.mean(y, axis=-1, keepdims=True)
    ms = jnp.mean(y * y, axis=-1, keepdims=True)
    var = jnp.maximum(ms - mu * mu, 0.0)
    yn = (y - mu) * jax.lax.rsqrt(var + ln_eps)
    o_ref[...] = (yn * gamma_ref[...].astype(jnp.float32)
                  + beta_ref[...].astype(jnp.float32)).astype(o_ref.dtype)


def _kernel_composed(h_ref, inp_ref,
                     wd_ref, bd_ref,
                     wdo_ref, bdo_ref,
                     wup_ref, bup_ref,
                     gamma_ref, beta_ref,
                     o_ref, *, ln_eps):
    f32 = jnp.float32
    # 1) dense: Linear(hidden, hidden); MXU matmul, f32 accumulation.
    x = jnp.dot(h_ref[...], wd_ref[...], preferred_element_type=f32)
    x = x + bd_ref[...].astype(f32)
    # 2) dropout -> identity (eval).  TODO(synk): training dropout needs pltpu.prng_*.
    # 3) adapter: composed (w_down @ omega) projection -> ReLU -> up-proj
    #    (1/sqrt(num_rfs) pre-folded into w_up on the host).
    phi = jnp.dot(x.astype(wdo_ref.dtype), wdo_ref[...], preferred_element_type=f32)
    phi = jnp.maximum(phi + bdo_ref[...].astype(f32), 0.0)
    up = jnp.dot(phi.astype(wup_ref.dtype), wup_ref[...], preferred_element_type=f32)
    up = up + bup_ref[...].astype(f32)
    # 4) adapter residual + input residual + LayerNorm.
    y = x + up + inp_ref[...].astype(f32)
    _layernorm_store(y, gamma_ref, beta_ref, o_ref, ln_eps)


def _kernel_split(h_ref, inp_ref,
                  wd_ref, bd_ref,
                  wdown_ref, bdown_ref,
                  omega_ref,
                  wup_ref, bup_ref,
                  gamma_ref, beta_ref,
                  o_ref, *, ln_eps):
    f32 = jnp.float32
    x = jnp.dot(h_ref[...], wd_ref[...], preferred_element_type=f32)
    x = x + bd_ref[...].astype(f32)
    z = jnp.dot(x.astype(wdown_ref.dtype), wdown_ref[...], preferred_element_type=f32)
    z = z + bdown_ref[...].astype(f32)
    phi = jnp.maximum(
        jnp.dot(z.astype(omega_ref.dtype), omega_ref[...], preferred_element_type=f32),
        0.0)
    up = jnp.dot(phi.astype(wup_ref.dtype), wup_ref[...], preferred_element_type=f32)
    up = up + bup_ref[...].astype(f32)
    y = x + up + inp_ref[...].astype(f32)
    _layernorm_store(y, gamma_ref, beta_ref, o_ref, ln_eps)


def _vmem_limit_bytes():
    # Generation-aware: 3/4 of physical per-core VMEM (~48 MiB v7x, ~96 MiB v5e/v6e).
    try:
        cap = int(pltpu.get_tpu_info().vmem_capacity_bytes)
    except Exception:
        cap = 64 << 20
    return min((cap * 3) // 4, 100 << 20)


def _pick_tile(T, block_tokens):
    # Keep >= 2 grid steps (even when possible) so the "parallel" token axis
    # actually shards across both v7x TensorCores and avoids a straggler step.
    if T > block_tokens:
        TM = block_tokens
        steps = -(-T // TM)
        if steps > 1 and steps % 2 == 1:
            TM = _round_up(-(-T // (steps + 1)), 8)
    elif T >= 16:
        TM = _round_up(-(-T // 2), 8)
    else:
        TM = T
    return TM


def relu_adapter_bert_self_output(hidden_states, input_tensor, params, *,
                                  num_rfs, layer_norm_eps=1e-12,
                                  compute_dtype=jnp.bfloat16,
                                  block_tokens=1024, lane_pad=128):
    """hidden_states, input_tensor: (B, S, H).

    params weights are stored [in, out] (consumed as x @ W).
    TODO(synk): PyTorch nn.Linear stores weight as [out, in]; transpose
    W_dense / W_down / W_up when loading a real checkpoint.
    """
    B, S, H = hidden_states.shape
    T = B * S
    compute_dtype = jnp.dtype(compute_dtype)
    out_dtype = compute_dtype

    h2 = hidden_states.reshape(T, H).astype(compute_dtype)
    i2 = input_tensor.reshape(T, H).astype(compute_dtype)

    # ---- host-side weight prep (f32 math, then cast to compute dtype) ------
    f32 = jnp.float32
    rf_scale = 1.0 / math.sqrt(float(num_rfs))
    w_dense = params["w_dense"].astype(compute_dtype)
    b_dense = params["b_dense"].astype(f32)
    w_down = params["w_down"].astype(f32)
    b_down = params["b_down"].astype(f32)
    omega = params["omega"].astype(f32)
    w_up = params["w_up"].astype(f32) * rf_scale       # fold 1/sqrt(num_rfs)
    b_up = params["b_up"].astype(f32)
    gamma = params["gamma"].astype(f32)
    beta = params["beta"].astype(f32)

    D = w_down.shape[1]
    R = omega.shape[1]
    Dp = _round_up(D, lane_pad)
    Rp = _round_up(R, lane_pad)

    # Compose w_down @ omega on the host when cheaper than the padded two-step
    # chain (exact linear composition; ReLU scale is already folded into w_up).
    compose = H * Rp <= H * Dp + Dp * Rp
    if compose:
        w_do = w_down @ omega                           # (H, R)
        b_do = b_down @ omega                           # (1, R)
        if Rp != R:
            w_do = jnp.pad(w_do, ((0, 0), (0, Rp - R)))
            b_do = jnp.pad(b_do, ((0, 0), (0, Rp - R)))
            w_up = jnp.pad(w_up, ((0, Rp - R), (0, 0)))
        adapter_weights = (w_do.astype(compute_dtype), b_do,
                           w_up.astype(compute_dtype), b_up)
        adapter_shapes = ((H, Rp), (1, Rp), (Rp, H), (1, H))
        kernel = functools.partial(_kernel_composed, ln_eps=layer_norm_eps)
        flops_adapter = H * Rp + Rp * H
    else:
        if Dp != D:
            w_down = jnp.pad(w_down, ((0, 0), (0, Dp - D)))
            b_down = jnp.pad(b_down, ((0, 0), (0, Dp - D)))
            omega = jnp.pad(omega, ((0, Dp - D), (0, 0)))
        if Rp != R:
            omega = jnp.pad(omega, ((0, 0), (0, Rp - R)))
            w_up = jnp.pad(w_up, ((0, Rp - R), (0, 0)))
        adapter_weights = (w_down.astype(compute_dtype), b_down,
                           omega.astype(compute_dtype),
                           w_up.astype(compute_dtype), b_up)
        adapter_shapes = ((H, Dp), (1, Dp), (Dp, Rp), (Rp, H), (1, H))
        kernel = functools.partial(_kernel_split, ln_eps=layer_norm_eps)
        flops_adapter = H * Dp + Dp * Rp + Rp * H

    # ---- token tiling -------------------------------------------------------
    TM = _pick_tile(T, block_tokens)
    grid = (pl.cdiv(T, TM),)

    row_spec = pl.BlockSpec((TM, H), lambda i: (i, 0))

    def resident(shape, single_buffer):
        # Constant index_map: DMA'd once; Buffered(1) drops the dead 2nd buffer.
        if single_buffer:
            return pl.BlockSpec(shape, lambda i: (0,) * len(shape),
                                pipeline_mode=pl.Buffered(1))
        return pl.BlockSpec(shape, lambda i: (0,) * len(shape))

    weight_arrays = (w_dense, b_dense) + adapter_weights + (gamma, beta)
    weight_shapes = ((H, H), (1, H)) + adapter_shapes + ((1, H), (1, H))

    in_bytes = compute_dtype.itemsize
    out_bytes = jnp.dtype(out_dtype).itemsize
    w_bytes = sum(int(a.size) * jnp.dtype(a.dtype).itemsize for a in weight_arrays)
    cost = pl.CostEstimate(
        flops=2 * T * (H * H + flops_adapter),
        transcendentals=T,                                # one rsqrt per token row
        bytes_accessed=2 * T * H * in_bytes + T * H * out_bytes + w_bytes,
    )

    def _call(single_buffer_weights):
        return pl.pallas_call(
            kernel,
            out_shape=jax.ShapeDtypeStruct((T, H), out_dtype),
            grid_spec=pltpu.PrefetchScalarGridSpec(
                num_scalar_prefetch=0,
                grid=grid,
                in_specs=[row_spec, row_spec]
                         + [resident(s, single_buffer_weights) for s in weight_shapes],
                out_specs=row_spec,
            ),
            compiler_params=pltpu.CompilerParams(
                dimension_semantics=("parallel",),
                vmem_limit_bytes=_vmem_limit_bytes()),
            cost_estimate=cost,
        )(h2, i2, *weight_arrays)

    try:
        out2 = _call(True)
    except Exception:
        # pipeline_mode=pl.Buffered(1) not honored on this build: fall back to
        # default (double-buffered) weight specs; correctness is identical.
        out2 = _call(False)

    return out2.reshape(B, S, H)


def init_params(key, hidden, down_sample, num_rfs, dtype=jnp.float32):
    ks = jax.random.split(key, 6)
    scale = 0.02
    return {
        "w_dense": (scale * jax.random.normal(ks[0], (hidden, hidden))).astype(dtype),
        "b_dense": jnp.zeros((1, hidden), dtype),
        "w_down":  (scale * jax.random.normal(ks[1], (hidden, down_sample))).astype(dtype),
        "b_down":  jnp.zeros((1, down_sample), dtype),
        "omega":   jax.random.normal(ks[2], (down_sample, num_rfs)).astype(dtype),
        "w_up":    (scale * jax.random.normal(ks[3], (num_rfs, hidden))).astype(dtype),
        "b_up":    jnp.zeros((1, hidden), dtype),
        "gamma":   jnp.ones((1, hidden), dtype),
        "beta":    jnp.zeros((1, hidden), dtype),
    }


def reference(hidden_states, input_tensor, params, *, num_rfs, layer_norm_eps=1e-12):
    x = hidden_states @ params["w_dense"] + params["b_dense"]
    z = x @ params["w_down"] + params["b_down"]
    phi = jnp.maximum(z @ params["omega"], 0.0) / math.sqrt(float(num_rfs))
    a = x + (phi @ params["w_up"] + params["b_up"])
    y = a + input_tensor
    mu = jnp.mean(y, axis=-1, keepdims=True)
    var = jnp.mean((y - mu) ** 2, axis=-1, keepdims=True)
    return (y - mu) / jnp.sqrt(var + layer_norm_eps) * params["gamma"] + params["beta"]


if __name__ == "__main__":
    B, S, H = 2, 8, 32       # batch, seq, hidden_size
    DOWN, NUM_RFS = 16, 64   # adapter down_sample, num_rfs

    key = jax.random.PRNGKey(0)
    k1, k2, k3 = jax.random.split(key, 3)
    hidden_states = jax.random.normal(k1, (B, S, H), jnp.float32)
    input_tensor = jax.random.normal(k2, (B, S, H), jnp.float32)
    params = init_params(k3, H, DOWN, NUM_RFS)

    ref = reference(hidden_states, input_tensor, params, num_rfs=NUM_RFS)

    # Exactness check on the f32 compute path (validates the math / composition).
    out_f32 = relu_adapter_bert_self_output(
        hidden_states, input_tensor, params, num_rfs=NUM_RFS,
        compute_dtype=jnp.float32)
    out_f32 = jax.block_until_ready(out_f32)
    assert out_f32.shape == (B, S, H)
    assert jnp.allclose(out_f32, ref, atol=1e-4, rtol=1e-4)

    # Performance path: bf16 weights/activation tiles, f32 MXU accumulation.
    out_bf16 = relu_adapter_bert_self_output(
        hidden_states, input_tensor, params, num_rfs=NUM_RFS,
        compute_dtype=jnp.bfloat16)
    out_bf16 = jax.block_until_ready(out_bf16)
    assert out_bf16.shape == (B, S, H)
    assert jnp.allclose(out_bf16.astype(jnp.float32), ref, atol=8e-2, rtol=8e-2)

    print("KERNEL_OK")
</pallas_src>

<mosaic_0001>
module attributes {stable_mosaic.version = 11 : i64} {
  func.func @_kernel_composed(%arg0: i32, %arg1: memref<8x32xf32, #tpu.memory_space<vmem>>, %arg2: memref<8x32xf32, #tpu.memory_space<vmem>>, %arg3: memref<32x32xf32, #tpu.memory_space<vmem>>, %arg4: memref<1x32xf32, #tpu.memory_space<vmem>>, %arg5: memref<32x128xf32, #tpu.memory_space<vmem>>, %arg6: memref<1x128xf32, #tpu.memory_space<vmem>>, %arg7: memref<128x32xf32, #tpu.memory_space<vmem>>, %arg8: memref<1x32xf32, #tpu.memory_space<vmem>>, %arg9: memref<1x32xf32, #tpu.memory_space<vmem>>, %arg10: memref<1x32xf32, #tpu.memory_space<vmem>>, %arg11: memref<8x32xf32, #tpu.memory_space<vmem>>) attributes {dimension_semantics = [#tpu.dimension_semantics<parallel>], iteration_bounds = array<i64: 2>, scalar_prefetch = 0 : i64, scratch_operands = 0 : i64, tpu.core_type = #tpu.core_type<tc>, window_params = [{transform_indices = @transform_0, window_bounds = array<i64: 8, 32>}, {transform_indices = @transform_1, window_bounds = array<i64: 8, 32>}, {pipeline_mode = #tpu.pipeline_mode<synchronous>, transform_indices = @transform_2, window_bounds = array<i64: 32, 32>}, {pipeline_mode = #tpu.pipeline_mode<synchronous>, transform_indices = @transform_3, window_bounds = array<i64: 1, 32>}, {pipeline_mode = #tpu.pipeline_mode<synchronous>, transform_indices = @transform_4, window_bounds = array<i64: 32, 128>}, {pipeline_mode = #tpu.pipeline_mode<synchronous>, transform_indices = @transform_5, window_bounds = array<i64: 1, 128>}, {pipeline_mode = #tpu.pipeline_mode<synchronous>, transform_indices = @transform_6, window_bounds = array<i64: 128, 32>}, {pipeline_mode = #tpu.pipeline_mode<synchronous>, transform_indices = @transform_7, window_bounds = array<i64: 1, 32>}, {pipeline_mode = #tpu.pipeline_mode<synchronous>, transform_indices = @transform_8, window_bounds = array<i64: 1, 32>}, {pipeline_mode = #tpu.pipeline_mode<synchronous>, transform_indices = @transform_9, window_bounds = array<i64: 1, 32>}, {transform_indices = @transform_10, window_bounds = array<i64: 8, 32>}]} {
    %c0 = arith.constant 0 : index
    %c0_0 = arith.constant 0 : index
    %0 = vector.load %arg1[%c0, %c0_0] : memref<8x32xf32, #tpu.memory_space<vmem>>, vector<8x32xf32>
    %c0_1 = arith.constant 0 : index
    %c0_2 = arith.constant 0 : index
    %1 = vector.load %arg3[%c0_1, %c0_2] : memref<32x32xf32, #tpu.memory_space<vmem>>, vector<32x32xf32>
    %cst = arith.constant dense<0.000000e+00> : vector<8x32xf32>
    %2 = tpu.matmul %0, %1, %cst {dimension_numbers = #tpu.dot_dimension_numbers<[1], [0], [0], [1], [0, 0, 1, 1], [], []>} : vector<8x32xf32>, vector<32x32xf32>, vector<8x32xf32> -> vector<8x32xf32>
    %c0_3 = arith.constant 0 : index
    %c0_4 = arith.constant 0 : index
    %3 = vector.load %arg4[%c0_3, %c0_4] : memref<1x32xf32, #tpu.memory_space<vmem>>, vector<1x32xf32>
    %4 = vector.broadcast %3 : vector<1x32xf32> to vector<8x32xf32>
    %5 = arith.addf %2, %4 : vector<8x32xf32>
    %c0_5 = arith.constant 0 : index
    %c0_6 = arith.constant 0 : index
    %6 = vector.load %arg5[%c0_5, %c0_6] : memref<32x128xf32, #tpu.memory_space<vmem>>, vector<32x128xf32>
    %cst_7 = arith.constant dense<0.000000e+00> : vector<8x128xf32>
    %7 = tpu.matmul %5, %6, %cst_7 {dimension_numbers = #tpu.dot_dimension_numbers<[1], [0], [0], [1], [0, 0, 1, 1], [], []>} : vector<8x32xf32>, vector<32x128xf32>, vector<8x128xf32> -> vector<8x128xf32>
    %c0_8 = arith.constant 0 : index
    %c0_9 = arith.constant 0 : index
    %8 = vector.load %arg6[%c0_8, %c0_9] : memref<1x128xf32, #tpu.memory_space<vmem>>, vector<1x128xf32>
    %9 = vector.broadcast %8 : vector<1x128xf32> to vector<8x128xf32>
    %10 = arith.addf %7, %9 : vector<8x128xf32>
    %cst_10 = arith.constant 0.000000e+00 : f32
    %11 = vector.broadcast %cst_10 : f32 to vector<8x128xf32>
    %12 = arith.maximumf %10, %11 : vector<8x128xf32>
    %c0_11 = arith.constant 0 : index
    %c0_12 = arith.constant 0 : index
    %13 = vector.load %arg7[%c0_11, %c0_12] : memref<128x32xf32, #tpu.memory_space<vmem>>, vector<128x32xf32>
    %cst_13 = arith.constant dense<0.000000e+00> : vector<8x32xf32>
    %14 = tpu.matmul %12, %13, %cst_13 {dimension_numbers = #tpu.dot_dimension_numbers<[1], [0], [0], [1], [0, 0, 1, 1], [], []>} : vector<8x128xf32>, vector<128x32xf32>, vector<8x32xf32> -> vector<8x32xf32>
    %c0_14 = arith.constant 0 : index
    %c0_15 = arith.constant 0 : index
    %15 = vector.load %arg8[%c0_14, %c0_15] : memref<1x32xf32, #tpu.memory_space<vmem>>, vector<1x32xf32>
    %16 = vector.broadcast %15 : vector<1x32xf32> to vector<8x32xf32>
    %17 = arith.addf %14, %16 : vector<8x32xf32>
    %18 = arith.addf %5, %17 : vector<8x32xf32>
    %c0_16 = arith.constant 0 : index
    %c0_17 = arith.constant 0 : index
    %19 = vector.load %arg2[%c0_16, %c0_17] : memref<8x32xf32, #tpu.memory_space<vmem>>, vector<8x32xf32>
    %20 = arith.addf %18, %19 : vector<8x32xf32>
    %cst_18 = arith.constant dense<0.000000e+00> : vector<8xf32>
    %21 = vector.multi_reduction <add>, %20, %cst_18 [1] : vector<8x32xf32> to vector<8xf32>
    %22 = vector.shape_cast %21 : vector<8xf32> to vector<8x1xf32>
    %cst_19 = arith.constant 3.200000e+01 : f32
    %23 = vector.broadcast %cst_19 : f32 to vector<8x1xf32>
    %24 = arith.divf %22, %23 : vector<8x1xf32>
    %25 = arith.mulf %20, %20 : vector<8x32xf32>
    %cst_20 = arith.constant dense<0.000000e+00> : vector<8xf32>
    %26 = vector.multi_reduction <add>, %25, %cst_20 [1] : vector<8x32xf32> to vector<8xf32>
    %27 = vector.shape_cast %26 : vector<8xf32> to vector<8x1xf32>
    %cst_21 = arith.constant 3.200000e+01 : f32
    %28 = vector.broadcast %cst_21 : f32 to vector<8x1xf32>
    %29 = arith.divf %27, %28 : vector<8x1xf32>
    %30 = arith.mulf %24, %24 : vector<8x1xf32>
    %31 = arith.subf %29, %30 : vector<8x1xf32>
    %cst_22 = arith.constant 0.000000e+00 : f32
    %32 = vector.broadcast %cst_22 : f32 to vector<8x1xf32>
    %33 = arith.maximumf %31, %32 : vector<8x1xf32>
    %34 = vector.broadcast %24 : vector<8x1xf32> to vector<8x32xf32>
    %35 = arith.subf %20, %34 : vector<8x32xf32>
    %cst_23 = arith.constant 9.99999996E-13 : f32
    %36 = vector.broadcast %cst_23 : f32 to vector<8x1xf32>
    %37 = arith.addf %33, %36 : vector<8x1xf32>
    %38 = math.rsqrt %37 : vector<8x1xf32>
    %39 = vector.broadcast %38 : vector<8x1xf32> to vector<8x32xf32>
    %40 = arith.mulf %35, %39 : vector<8x32xf32>
    %c0_24 = arith.constant 0 : index
    %c0_25 = arith.constant 0 : index
    %41 = vector.load %arg9[%c0_24, %c0_25] : memref<1x32xf32, #tpu.memory_space<vmem>>, vector<1x32xf32>
    %42 = vector.broadcast %41 : vector<1x32xf32> to vector<8x32xf32>
    %43 = arith.mulf %40, %42 : vector<8x32xf32>
    %c0_26 = arith.constant 0 : index
    %c0_27 = arith.constant 0 : index
    %44 = vector.load %arg10[%c0_26, %c0_27] : memref<1x32xf32, #tpu.memory_space<vmem>>, vector<1x32xf32>
    %45 = vector.broadcast %44 : vector<1x32xf32> to vector<8x32xf32>
    %46 = arith.addf %43, %45 : vector<8x32xf32>
    %c0_28 = arith.constant 0 : index
    %c0_29 = arith.constant 0 : index
    %47 = vector.load %arg11[%c0_28, %c0_29] : memref<8x32xf32, #tpu.memory_space<vmem>>, vector<8x32xf32>
    tpu.vector_store %arg11[%c0_28, %c0_29], %46 {strides = array<i32>} : memref<8x32xf32, #tpu.memory_space<vmem>>, vector<8x32xf32>,
    return
  }
  func.func @transform_0(%arg0: i32) -> (i32, i32) {
    %c0_i32 = arith.constant 0 : i32
    %c0_i32_0 = arith.constant 0 : i32
    return %arg0, %c0_i32 : i32, i32
  }
  func.func @transform_1(%arg0: i32) -> (i32, i32) {
    %c0_i32 = arith.constant 0 : i32
    %c0_i32_0 = arith.constant 0 : i32
    return %arg0, %c0_i32 : i32, i32
  }
  func.func @transform_2(%arg0: i32) -> (i32, i32) {
    %c0_i32 = arith.constant 0 : i32
    %c0_i32_0 = arith.constant 0 : i32
    %c0_i32_1 = arith.constant 0 : i32
    return %c0_i32, %c0_i32_0 : i32, i32
  }
  func.func @transform_3(%arg0: i32) -> (i32, i32) {
    %c0_i32 = arith.constant 0 : i32
    %c0_i32_0 = arith.constant 0 : i32
    %c0_i32_1 = arith.constant 0 : i32
    return %c0_i32, %c0_i32_0 : i32, i32
  }
  func.func @transform_4(%arg0: i32) -> (i32, i32) {
    %c0_i32 = arith.constant 0 : i32
    %c0_i32_0 = arith.constant 0 : i32
    %c0_i32_1 = arith.constant 0 : i32
    return %c0_i32, %c0_i32_0 : i32, i32
  }
  func.func @transform_5(%arg0: i32) -> (i32, i32) {
    %c0_i32 = arith.constant 0 : i32
    %c0_i32_0 = arith.constant 0 : i32
    %c0_i32_1 = arith.constant 0 : i32
    return %c0_i32, %c0_i32_0 : i32, i32
  }
  func.func @transform_6(%arg0: i32) -> (i32, i32) {
    %c0_i32 = arith.constant 0 : i32
    %c0_i32_0 = arith.constant 0 : i32
    %c0_i32_1 = arith.constant 0 : i32
    return %c0_i32, %c0_i32_0 : i32, i32
  }
  func.func @transform_7(%arg0: i32) -> (i32, i32) {
    %c0_i32 = arith.constant 0 : i32
    %c0_i32_0 = arith.constant 0 : i32
    %c0_i32_1 = arith.constant 0 : i32
    return %c0_i32, %c0_i32_0 : i32, i32
  }
  func.func @transform_8(%arg0: i32) -> (i32, i32) {
    %c0_i32 = arith.constant 0 : i32
    %c0_i32_0 = arith.constant 0 : i32
    %c0_i32_1 = arith.constant 0 : i32
    return %c0_i32, %c0_i32_0 : i32, i32
  }
  func.func @transform_9(%arg0: i32) -> (i32, i32) {
    %c0_i32 = arith.constant 0 : i32
    %c0_i32_0 = arith.constant 0 : i32
    %c0_i32_1 = arith.constant 0 : i32
    return %c0_i32, %c0_i32_0 : i32, i32
  }
  func.func @transform_10(%arg0: i32) -> (i32, i32) {
    %c0_i32 = arith.constant 0 : i32
    %c0_i32_0 = arith.constant 0 : i32
    return %arg0, %c0_i32 : i32, i32
  }
}

module attributes {stable_mosaic.version = 11 : i64} {
  func.func @_kernel_composed(%arg0: i32, %arg1: memref<8x32xf32, #tpu.memory_space<vmem>>, %arg2: memref<8x32xf32, #tpu.memory_space<vmem>>, %arg3: memref<32x32xf32, #tpu.memory_space<vmem>>, %arg4: memref<1x32xf32, #tpu.memory_space<vmem>>, %arg5: memref<32x128xf32, #tpu.memory_space<vmem>>, %arg6: memref<1x128xf32, #tpu.memory_space<vmem>>, %arg7: memref<128x32xf32, #tpu.memory_space<vmem>>, %arg8: memref<1x32xf32, #tpu.memory_space<vmem>>, %arg9: memref<1x32xf32, #tpu.memory_space<vmem>>, %arg10: memref<1x32xf32, #tpu.memory_space<vmem>>, %arg11: memref<8x32xf32, #tpu.memory_space<vmem>>) attributes {dimension_semantics = [#tpu.dimension_semantics<parallel>], iteration_bounds = array<i64: 2>, scalar_prefetch = 0 : i64, scratch_operands = 0 : i64, tpu.core_type = #tpu.core_type<tc>, window_params = [{transform_indices = @transform_0, window_bounds = array<i64: 8, 32>}, {transform_indices = @transform_1, window_bounds = array<i64: 8, 32>}, {pipeline_mode = #tpu.pipeline_mode<synchronous>, transform_indices = @transform_2, window_bounds = array<i64: 32, 32>}, {pipeline_mode = #tpu.pipeline_mode<synchronous>, transform_indices = @transform_3, window_bounds = array<i64: 1, 32>}, {pipeline_mode = #tpu.pipeline_mode<synchronous>, transform_indices = @transform_4, window_bounds = array<i64: 32, 128>}, {pipeline_mode = #tpu.pipeline_mode<synchronous>, transform_indices = @transform_5, window_bounds = array<i64: 1, 128>}, {pipeline_mode = #tpu.pipeline_mode<synchronous>, transform_indices = @transform_6, window_bounds = array<i64: 128, 32>}, {pipeline_mode = #tpu.pipeline_mode<synchronous>, transform_indices = @transform_7, window_bounds = array<i64: 1, 32>}, {pipeline_mode = #tpu.pipeline_mode<synchronous>, transform_indices = @transform_8, window_bounds = array<i64: 1, 32>}, {pipeline_mode = #tpu.pipeline_mode<synchronous>, transform_indices = @transform_9, window_bounds = array<i64: 1, 32>}, {transform_indices = @transform_10, window_bounds = array<i64: 8, 32>}]} {
    %c0 = arith.constant 0 : index
    %c0_0 = arith.constant 0 : index
    %0 = vector.load %arg1[%c0, %c0_0] : memref<8x32xf32, #tpu.memory_space<vmem>>, vector<8x32xf32>
    %c0_1 = arith.constant 0 : index
    %c0_2 = arith.constant 0 : index
    %1 = vector.load %arg3[%c0_1, %c0_2] : memref<32x32xf32, #tpu.memory_space<vmem>>, vector<32x32xf32>
    %cst = arith.constant dense<0.000000e+00> : vector<8x32xf32>
    %2 = tpu.matmul %0, %1, %cst {dimension_numbers = #tpu.dot_dimension_numbers<[1], [0], [0], [1], [0, 0, 1, 1], [], []>} : vector<8x32xf32>, vector<32x32xf32>, vector<8x32xf32> -> vector<8x32xf32>
    %c0_3 = arith.constant 0 : index
    %c0_4 = arith.constant 0 : index
    %3 = vector.load %arg4[%c0_3, %c0_4] : memref<1x32xf32, #tpu.memory_space<vmem>>, vector<1x32xf32>
    %4 = vector.broadcast %3 : vector<1x32xf32> to vector<8x32xf32>
    %5 = arith.addf %2, %4 : vector<8x32xf32>
    %c0_5 = arith.constant 0 : index
    %c0_6 = arith.constant 0 : index
    %6 = vector.load %arg5[%c0_5, %c0_6] : memref<32x128xf32, #tpu.memory_space<vmem>>, vector<32x128xf32>
    %cst_7 = arith.constant dense<0.000000e+00> : vector<8x128xf32>
    %7 = tpu.matmul %5, %6, %cst_7 {dimension_numbers = #tpu.dot_dimension_numbers<[1], [0], [0], [1], [0, 0, 1, 1], [], []>} : vector<8x32xf32>, vector<32x128xf32>, vector<8x128xf32> -> vector<8x128xf32>
    %c0_8 = arith.constant 0 : index
    %c0_9 = arith.constant 0 : index
    %8 = vector.load %arg6[%c0_8, %c0_9] : memref<1x128xf32, #tpu.memory_space<vmem>>, vector<1x128xf32>
    %9 = vector.broadcast %8 : vector<1x128xf32> to vector<8x128xf32>
    %10 = arith.addf %7, %9 : vector<8x128xf32>
    %cst_10 = arith.constant 0.000000e+00 : f32
    %11 = vector.broadcast %cst_10 : f32 to vector<8x128xf32>
    %12 = arith.maximumf %10, %11 : vector<8x128xf32>
    %c0_11 = arith.constant 0 : index
    %c0_12 = arith.constant 0 : index
    %13 = vector.load %arg7[%c0_11, %c0_12] : memref<128x32xf32, #tpu.memory_space<vmem>>, vector<128x32xf32>
    %cst_13 = arith.constant dense<0.000000e+00> : vector<8x32xf32>
    %14 = tpu.matmul %12, %13, %cst_13 {dimension_numbers = #tpu.dot_dimension_numbers<[1], [0], [0], [1], [0, 0, 1, 1], [], []>} : vector<8x128xf32>, vector<128x32xf32>, vector<8x32xf32> -> vector<8x32xf32>
    %c0_14 = arith.constant 0 : index
    %c0_15 = arith.constant 0 : index
    %15 = vector.load %arg8[%c0_14, %c0_15] : memref<1x32xf32, #tpu.memory_space<vmem>>, vector<1x32xf32>
    %16 = vector.broadcast %15 : vector<1x32xf32> to vector<8x32xf32>
    %17 = arith.addf %14, %16 : vector<8x32xf32>
    %18 = arith.addf %5, %17 : vector<8x32xf32>
    %c0_16 = arith.constant 0 : index
    %c0_17 = arith.constant 0 : index
    %19 = vector.load %arg2[%c0_16, %c0_17] : memref<8x32xf32, #tpu.memory_space<vmem>>, vector<8x32xf32>
    %20 = arith.addf %18, %19 : vector<8x32xf32>
    %cst_18 = arith.constant dense<0.000000e+00> : vector<8xf32>
    %21 = vector.multi_reduction <add>, %20, %cst_18 [1] : vector<8x32xf32> to vector<8xf32>
    %22 = vector.shape_cast %21 : vector<8xf32> to vector<8x1xf32>
    %cst_19 = arith.constant 3.200000e+01 : f32
    %23 = vector.broadcast %cst_19 : f32 to vector<8x1xf32>
    %24 = arith.divf %22, %23 : vector<8x1xf32>
    %25 = arith.mulf %20, %20 : vector<8x32xf32>
    %cst_20 = arith.constant dense<0.000000e+00> : vector<8xf32>
    %26 = vector.multi_reduction <add>, %25, %cst_20 [1] : vector<8x32xf32> to vector<8xf32>
    %27 = vector.shape_cast %26 : vector<8xf32> to vector<8x1xf32>
    %cst_21 = arith.constant 3.200000e+01 : f32
    %28 = vector.broadcast %cst_21 : f32 to vector<8x1xf32>
    %29 = arith.divf %27, %28 : vector<8x1xf32>
    %30 = arith.mulf %24, %24 : vector<8x1xf32>
    %31 = arith.subf %29, %30 : vector<8x1xf32>
    %cst_22 = arith.constant 0.000000e+00 : f32
    %32 = vector.broadcast %cst_22 : f32 to vector<8x1xf32>
    %33 = arith.maximumf %31, %32 : vector<8x1xf32>
    %34 = vector.broadcast %24 : vector<8x1xf32> to vector<8x32xf32>
    %35 = arith.subf %20, %34 : vector<8x32xf32>
    %cst_23 = arith.constant 9.99999996E-13 : f32
    %36 = vector.broadcast %cst_23 : f32 to vector<8x1xf32>
    %37 = arith.addf %33, %36 : vector<8x1xf32>
    %38 = math.rsqrt %37 : vector<8x1xf32>
    %39 = vector.broadcast %38 : vector<8x1xf32> to vector<8x32xf32>
    %40 = arith.mulf %35, %39 : vector<8x32xf32>
    %c0_24 = arith.constant 0 : index
    %c0_25 = arith.constant 0 : index
    %41 = vector.load %arg9[%c0_24, %c0_25] : memref<1x32xf32, #tpu.memory_space<vmem>>, vector<1x32xf32>
    %42 = vector.broadcast %41 : vector<1x32xf32> to vector<8x32xf32>
    %43 = arith.mulf %40, %42 : vector<8x32xf32>
    %c0_26 = arith.constant 0 : index
    %c0_27 = arith.constant 0 : index
    %44 = vector.load %arg10[%c0_26, %c0_27] : memref<1x32xf32, #tpu.memory_space<vmem>>, vector<1x32xf32>
    %45 = vector.broadcast %44 : vector<1x32xf32> to vector<8x32xf32>
    %46 = arith.addf %43, %45 : vector<8x32xf32>
    %c0_28 = arith.constant 0 : index
    %c0_29 = arith.constant 0 : index
    %47 = vector.load %arg11[%c0_28, %c0_29] : memref<8x32xf32, #tpu.memory_space<vmem>>, vector<8x32xf32>
    tpu.vector_store %arg11[%c0_28, %c0_29], %46 {strides = array<i32>} : memref<8x32xf32, #tpu.memory_space<vmem>>, vector<8x32xf32>,
    return
  }
  func.func @transform_0(%arg0: i32) -> (i32, i32) {
    %c0_i32 = arith.constant 0 : i32
    %c0_i32_0 = arith.constant 0 : i32
    return %arg0, %c0_i32 : i32, i32
  }
  func.func @transform_1(%arg0: i32) -> (i32, i32) {
    %c0_i32 = arith.constant 0 : i32
    %c0_i32_0 = arith.constant 0 : i32
    return %arg0, %c0_i32 : i32, i32
  }
  func.func @transform_2(%arg0: i32) -> (i32, i32) {
    %c0_i32 = arith.constant 0 : i32
    %c0_i32_0 = arith.constant 0 : i32
    %c0_i32_1 = arith.constant 0 : i32
    return %c0_i32, %c0_i32_0 : i32, i32
  }
  func.func @transform_3(%arg0: i32) -> (i32, i32) {
    %c0_i32 = arith.constant 0 : i32
    %c0_i32_0 = arith.constant 0 : i32
    %c0_i32_1 = arith.constant 0 : i32
    return %c0_i32, %c0_i32_0 : i32, i32
  }
  func.func @transform_4(%arg0: i32) -> (i32, i32) {
    %c0_i32 = arith.constant 0 : i32
    %c0_i32_0 = arith.constant 0 : i32
    %c0_i32_1 = arith.constant 0 : i32
    return %c0_i32, %c0_i32_0 : i32, i32
  }
  func.func @transform_5(%arg0: i32) -> (i32, i32) {
    %c0_i32 = arith.constant 0 : i32
    %c0_i32_0 = arith.constant 0 : i32
    %c0_i32_1 = arith.constant 0 : i32
    return %c0_i32, %c0_i32_0 : i32, i32
  }
  func.func @transform_6(%arg0: i32) -> (i32, i32) {
    %c0_i32 = arith.constant 0 : i32
    %c0_i32_0 = arith.constant 0 : i32
    %c0_i32_1 = arith.constant 0 : i32
    return %c0_i32, %c0_i32_0 : i32, i32
  }
  func.func @transform_7(%arg0: i32) -> (i32, i32) {
    %c0_i32 = arith.constant 0 : i32
    %c0_i32_0 = arith.constant 0 : i32
    %c0_i32_1 = arith.constant 0 : i32
    return %c0_i32, %c0_i32_0 : i32, i32
  }
  func.func @transform_8(%arg0: i32) -> (i32, i32) {
    %c0_i32 = arith.constant 0 : i32
    %c0_i32_0 = arith.constant 0 : i32
    %c0_i32_1 = arith.constant 0 : i32
    return %c0_i32, %c0_i32_0 : i32, i32
  }
  func.func @transform_9(%arg0: i32) -> (i32, i32) {
    %c0_i32 = arith.constant 0 : i32
    %c0_i32_0 = arith.constant 0 : i32
    %c0_i32_1 = arith.constant 0 : i32
    return %c0_i32, %c0_i32_0 : i32, i32
  }
  func.func @transform_10(%arg0: i32) -> (i32, i32) {
    %c0_i32 = arith.constant 0 : i32
    %c0_i32_0 = arith.constant 0 : i32
    return %arg0, %c0_i32 : i32, i32
  }
}

</mosaic_0001>

<llo_original>
// kernel: tpu_custom_call.1
$region0: #{tpu_custom_call.1}
  #allocation0 [shape = 'u32[]', space=smem, size = 0x4, offset = 0x4, fixed_abs, tag = 'smem constant byte address 0x4 - core index']
  #allocation1 [shape = 'u32[144,128]{1,0:T(1,128)}', space=vmem, size = 0x12000, scoped, tag = 'internal scratch']
  %s0 = inlined_call_operand.vmem [shape: f32[16,32], index: 0, kind: input, shape index: {}]
  %s1 = inlined_call_operand.vmem [shape: f32[16,32], index: 1, kind: input, shape index: {}]
  %s2 = inlined_call_operand.vmem [shape: f32[32,32], index: 2, kind: input, shape index: {}]
  %s3 = inlined_call_operand.vmem [shape: f32[1,32], index: 3, kind: input, shape index: {}]
  %s4 = inlined_call_operand.vmem [shape: f32[32,128], index: 4, kind: input, shape index: {}]
  %s5 = inlined_call_operand.vmem [shape: f32[1,128], index: 5, kind: input, shape index: {}]
  %s6 = inlined_call_operand.vmem [shape: f32[128,32], index: 6, kind: input, shape index: {}]
  %s7 = inlined_call_operand.vmem [shape: f32[1,32], index: 7, kind: input, shape index: {}]
  %s8 = inlined_call_operand.vmem [shape: f32[1,32], index: 8, kind: input, shape index: {}]
  %s9 = inlined_call_operand.vmem [shape: f32[1,32], index: 9, kind: input, shape index: {}]
  %s10 = inlined_call_operand.hbm [shape: f32[16,32], index: 10, kind: output, shape index: {}]
  %s11 = sld [smem:[#allocation0]]
  $region73: #{tpu_custom_call.1} parent=0
    _
  %s13 = ssub.s32 1, %s11
  %s14 = scalar_select 0, %s13, %s11
  $region1: #{tpu_custom_call.1} parent=0
    #allocation2 [shape = 'u8[8192]{0}', space=vmem, size = 0x2000, scoped, tag = 'output window, operand 0']
    #allocation3 [shape = 's32[2]{0}', space=sflag, size = 0x8, scoped, tag = 'scoped memory for tpu_custom_call.1']
    %15 = vsyncpa [#allocation3], 0
    %s16 = scalar_lea.sflag [#allocation3], 1
    %17 = vsyncpa %s16, 0
    loop: start=0, step=1, limit=4
    $region2: #{tpu_custom_call.1} parent=1 // loop_pre_header
      _
    $region3: #{tpu_custom_call.1} parent=1 // loop_header
      %s19 = sphi 0, %s23
      %p20 = scmp.ge.s32.totalorder %s19, 4
      %s29 = sphi 0, %s31
      %s32 = sphi 0, %s29
      %s33 = sphi 0, %s32
      %s49 = sphi 0, %s33
      %s55 = sphi 0, %s57
      %s58 = sphi 0, %s55
      %s59 = sphi 0, %s58
      %s75 = sphi 0, %s59
      %s79 = sphi 0, %s79
      %s81 = sphi 0, %s79
      %s82 = sphi 0, %s81
      %s96 = sphi 0, %s82
      %s100 = sphi 0, %s100
      %s102 = sphi 0, %s100
      %s103 = sphi 0, %s102
      %s117 = sphi 0, %s103
      %s121 = sphi 0, %s121
      %s123 = sphi 0, %s121
      %s124 = sphi 0, %s123
      %s138 = sphi 0, %s124
      %s142 = sphi 0, %s142
      %s144 = sphi 0, %s142
      %s145 = sphi 0, %s144
      %s159 = sphi 0, %s145
      %s163 = sphi 0, %s163
      %s165 = sphi 0, %s163
      %s166 = sphi 0, %s165
      %s180 = sphi 0, %s166
      %s184 = sphi 0, %s184
      %s186 = sphi 0, %s184
      %s187 = sphi 0, %s186
      %s201 = sphi 0, %s187
      %s205 = sphi 0, %s205
      %s207 = sphi 0, %s205
      %s208 = sphi 0, %s207
      %s222 = sphi 0, %s208
      %s226 = sphi 0, %s226
      %s228 = sphi 0, %s226
      %s229 = sphi 0, %s228
      %s243 = sphi 0, %s229
      %s249 = sphi 0, %s251
      %s252 = sphi 0, %s249
      %s253 = sphi 0, %s252
      %s269 = sphi 0, %s253
    $region4: #{tpu_custom_call.1} parent=1 // loop_header_branch
      %22 = sbr.rel (%p20) target = $region8
    $region5: #{tpu_custom_call.1} parent=1 // loop_body
      %s24 = ssub.s32 %s19, 1
      %s25 = ssub.s32 %s19, 2
      %s26 = sadd.s32 %s19, 1
      %s27 = ssub.s32 %s19, %s26
      %p28 = scmp.eq.s32.totalorder %s27, 0
      %s30 = sadd.s32 %s29, 1
      %s31 = scalar_select %p28, %s29, %s30
      %p34 = pneg %p28
      %p35 = scmp.eq.s32.totalorder %s19, 1
      %p36 = por %p34, %p35
      %p37 = scmp.ne.s32.totalorder %s29, %s32
      %p38 = scmp.eq.s32.totalorder %s19, 0
      %p39 = por %p37, %p38
      %p40 = scmp.ne.s32.totalorder %s29, %s32
      %p41 = scmp.eq.s32.totalorder %s24, 1
      %p42 = por %p40, %p41
      %p43 = scmp.ne.s32.totalorder %s32, %s33
      %p44 = scmp.eq.s32.totalorder %s24, 0
      %p45 = por %p43, %p44
      %p46 = scmp.ne.s32.totalorder %s32, %s33
      %p47 = scmp.eq.s32.totalorder %s25, 1
      %p48 = por %p46, %p47
      %p50 = scmp.ne.s32.totalorder %s33, %s49
      %p51 = scmp.eq.s32.totalorder %s25, 0
      %p52 = por %p50, %p51
      %s53 = ssub.s32 %s19, %s26
      %p54 = scmp.eq.s32.totalorder %s53, 0
      %s56 = sadd.s32 %s55, 1
      %s57 = scalar_select %p54, %s55, %s56
      %p60 = pneg %p54
      %p61 = scmp.eq.s32.totalorder %s19, 1
      %p62 = por %p60, %p61
      %p63 = scmp.ne.s32.totalorder %s55, %s58
      %p64 = scmp.eq.s32.totalorder %s19, 0
      %p65 = por %p63, %p64
      %p66 = scmp.ne.s32.totalorder %s55, %s58
      %p67 = scmp.eq.s32.totalorder %s24, 1
      %p68 = por %p66, %p67
      %p69 = scmp.ne.s32.totalorder %s58, %s59
      %p70 = scmp.eq.s32.totalorder %s24, 0
      %p71 = por %p69, %p70
      %p72 = scmp.ne.s32.totalorder %s58, %s59
      %p73 = scmp.eq.s32.totalorder %s25, 1
      %p74 = por %p72, %p73
      %p76 = scmp.ne.s32.totalorder %s59, %s75
      %p77 = scmp.eq.s32.totalorder %s25, 0
      %p78 = por %p76, %p77
      %s80 = sadd.s32 %s79, 1
      %p83 = scmp.eq.s32.totalorder %s19, 1
      %p84 = scmp.ne.s32.totalorder %s79, %s81
      %p85 = scmp.eq.s32.totalorder %s19, 0
      %p86 = por %p84, %p85
      %p87 = scmp.ne.s32.totalorder %s79, %s81
      %p88 = scmp.eq.s32.totalorder %s24, 1
      %p89 = por %p87, %p88
      %p90 = scmp.ne.s32.totalorder %s81, %s82
      %p91 = scmp.eq.s32.totalorder %s24, 0
      %p92 = por %p90, %p91
      %p93 = scmp.ne.s32.totalorder %s81, %s82
      %p94 = scmp.eq.s32.totalorder %s25, 1
      %p95 = por %p93, %p94
      %p97 = scmp.ne.s32.totalorder %s82, %s96
      %p98 = scmp.eq.s32.totalorder %s25, 0
      %p99 = por %p97, %p98
      %s101 = sadd.s32 %s100, 1
      %p104 = scmp.eq.s32.totalorder %s19, 1
      %p105 = scmp.ne.s32.totalorder %s100, %s102
      %p106 = scmp.eq.s32.totalorder %s19, 0
      %p107 = por %p105, %p106
      %p108 = scmp.ne.s32.totalorder %s100, %s102
      %p109 = scmp.eq.s32.totalorder %s24, 1
      %p110 = por %p108, %p109
      %p111 = scmp.ne.s32.totalorder %s102, %s103
      %p112 = scmp.eq.s32.totalorder %s24, 0
      %p113 = por %p111, %p112
      %p114 = scmp.ne.s32.totalorder %s102, %s103
      %p115 = scmp.eq.s32.totalorder %s25, 1
      %p116 = por %p114, %p115
      %p118 = scmp.ne.s32.totalorder %s103, %s117
      %p119 = scmp.eq.s32.totalorder %s25, 0
      %p120 = por %p118, %p119
      %s122 = sadd.s32 %s121, 1
      %p125 = scmp.eq.s32.totalorder %s19, 1
      %p126 = scmp.ne.s32.totalorder %s121, %s123
      %p127 = scmp.eq.s32.totalorder %s19, 0
      %p128 = por %p126, %p127
      %p129 = scmp.ne.s32.totalorder %s121, %s123
      %p130 = scmp.eq.s32.totalorder %s24, 1
      %p131 = por %p129, %p130
      %p132 = scmp.ne.s32.totalorder %s123, %s124
      %p133 = scmp.eq.s32.totalorder %s24, 0
      %p134 = por %p132, %p133
      %p135 = scmp.ne.s32.totalorder %s123, %s124
      %p136 = scmp.eq.s32.totalorder %s25, 1
      %p137 = por %p135, %p136
      %p139 = scmp.ne.s32.totalorder %s124, %s138
      %p140 = scmp.eq.s32.totalorder %s25, 0
      %p141 = por %p139, %p140
      %s143 = sadd.s32 %s142, 1
      %p146 = scmp.eq.s32.totalorder %s19, 1
      %p147 = scmp.ne.s32.totalorder %s142, %s144
      %p148 = scmp.eq.s32.totalorder %s19, 0
      %p149 = por %p147, %p148
      %p150 = scmp.ne.s32.totalorder %s142, %s144
      %p151 = scmp.eq.s32.totalorder %s24, 1
      %p152 = por %p150, %p151
      %p153 = scmp.ne.s32.totalorder %s144, %s145
      %p154 = scmp.eq.s32.totalorder %s24, 0
      %p155 = por %p153, %p154
      %p156 = scmp.ne.s32.totalorder %s144, %s145
      %p157 = scmp.eq.s32.totalorder %s25, 1
      %p158 = por %p156, %p157
      %p160 = scmp.ne.s32.totalorder %s145, %s159
      %p161 = scmp.eq.s32.totalorder %s25, 0
      %p162 = por %p160, %p161
      %s164 = sadd.s32 %s163, 1
      %p167 = scmp.eq.s32.totalorder %s19, 1
      %p168 = scmp.ne.s32.totalorder %s163, %s165
      %p169 = scmp.eq.s32.totalorder %s19, 0
      %p170 = por %p168, %p169
      %p171 = scmp.ne.s32.totalorder %s163, %s165
      %p172 = scmp.eq.s32.totalorder %s24, 1
      %p173 = por %p171, %p172
      %p174 = scmp.ne.s32.totalorder %s165, %s166
      %p175 = scmp.eq.s32.totalorder %s24, 0
      %p176 = por %p174, %p175
      %p177 = scmp.ne.s32.totalorder %s165, %s166
      %p178 = scmp.eq.s32.totalorder %s25, 1
      %p179 = por %p177, %p178
      %p181 = scmp.ne.s32.totalorder %s166, %s180
      %p182 = scmp.eq.s32.totalorder %s25, 0
      %p183 = por %p181, %p182
      %s185 = sadd.s32 %s184, 1
      %p188 = scmp.eq.s32.totalorder %s19, 1
      %p189 = scmp.ne.s32.totalorder %s184, %s186
      %p190 = scmp.eq.s32.totalorder %s19, 0
      %p191 = por %p189, %p190
      %p192 = scmp.ne.s32.totalorder %s184, %s186
      %p193 = scmp.eq.s32.totalorder %s24, 1
      %p194 = por %p192, %p193
      %p195 = scmp.ne.s32.totalorder %s186, %s187
      %p196 = scmp.eq.s32.totalorder %s24, 0
      %p197 = por %p195, %p196
      %p198 = scmp.ne.s32.totalorder %s186, %s187
      %p199 = scmp.eq.s32.totalorder %s25, 1
      %p200 = por %p198, %p199
      %p202 = scmp.ne.s32.totalorder %s187, %s201
      %p203 = scmp.eq.s32.totalorder %s25, 0
      %p204 = por %p202, %p203
      %s206 = sadd.s32 %s205, 1
      %p209 = scmp.eq.s32.totalorder %s19, 1
      %p210 = scmp.ne.s32.totalorder %s205, %s207
      %p211 = scmp.eq.s32.totalorder %s19, 0
      %p212 = por %p210, %p211
      %p213 = scmp.ne.s32.totalorder %s205, %s207
      %p214 = scmp.eq.s32.totalorder %s24, 1
      %p215 = por %p213, %p214
      %p216 = scmp.ne.s32.totalorder %s207, %s208
      %p217 = scmp.eq.s32.totalorder %s24, 0
      %p218 = por %p216, %p217
      %p219 = scmp.ne.s32.totalorder %s207, %s208
      %p220 = scmp.eq.s32.totalorder %s25, 1
      %p221 = por %p219, %p220
      %p223 = scmp.ne.s32.totalorder %s208, %s222
      %p224 = scmp.eq.s32.totalorder %s25, 0
      %p225 = por %p223, %p224
      %s227 = sadd.s32 %s226, 1
      %p230 = scmp.eq.s32.totalorder %s19, 1
      %p231 = scmp.ne.s32.totalorder %s226, %s228
      %p232 = scmp.eq.s32.totalorder %s19, 0
      %p233 = por %p231, %p232
      %p234 = scmp.ne.s32.totalorder %s226, %s228
      %p235 = scmp.eq.s32.totalorder %s24, 1
      %p236 = por %p234, %p235
      %p237 = scmp.ne.s32.totalorder %s228, %s229
      %p238 = scmp.eq.s32.totalorder %s24, 0
      %p239 = por %p237, %p238
      %p240 = scmp.ne.s32.totalorder %s228, %s229
      %p241 = scmp.eq.s32.totalorder %s25, 1
      %p242 = por %p240, %p241
      %p244 = scmp.ne.s32.totalorder %s229, %s243
      %p245 = scmp.eq.s32.totalorder %s25, 0
      %p246 = por %p244, %p245
      %s247 = ssub.s32 %s19, %s26
      %p248 = scmp.eq.s32.totalorder %s247, 0
      %s250 = sadd.s32 %s249, 1
      %s251 = scalar_select %p248, %s249, %s250
      %p254 = pneg %p248
      %p255 = scmp.eq.s32.totalorder %s19, 1
      %p256 = por %p254, %p255
      %p257 = scmp.ne.s32.totalorder %s249, %s252
      %p258 = scmp.eq.s32.totalorder %s19, 0
      %p259 = por %p257, %p258
      %p260 = scmp.ne.s32.totalorder %s249, %s252
      %p261 = scmp.eq.s32.totalorder %s24, 1
      %p262 = por %p260, %p261
      %p263 = scmp.ne.s32.totalorder %s252, %s253
      %p264 = scmp.eq.s32.totalorder %s24, 0
      %p265 = por %p263, %p264
      %p266 = scmp.ne.s32.totalorder %s252, %s253
      %p267 = scmp.eq.s32.totalorder %s25, 1
      %p268 = por %p266, %p267
      %p270 = scmp.ne.s32.totalorder %s253, %s269
      %p271 = scmp.eq.s32.totalorder %s25, 0
      %p272 = por %p270, %p271
      %p273 = scmp.le.s32.totalorder 1, %s19
      %p274 = scmp.lt.s32.totalorder %s19, 3
      %p275 = pnand %p273, %p274
      %p276 = pneg %p275
      // Predicated region
      $region9: #{tpu_custom_call.1} parent=5 // pred_check
        _
      $region10: #{tpu_custom_call.1} parent=5 // pred_check_branch
        %278 = sbr.rel (%p275) target = $region12
      $region11: #{tpu_custom_call.1} parent=5 // pred_region
        %s279 = ssub.s32 %s19, 1
        // Predicated region
        $region13: #{tpu_custom_call.1} parent=11 // pred_check
          %p280 = pneg %p92
        $region14: #{tpu_custom_call.1} parent=11 // pred_check_branch
          %282 = sbr.rel (%p280) target = $region16
        $region15: #{tpu_custom_call.1} parent=11 // pred_region
          _
        $region16: #{tpu_custom_call.1} parent=11 // pred_fallthru
          _
        // Predicated region
        $region17: #{tpu_custom_call.1} parent=11 // pred_check
          %p283 = pneg %p113
        $region18: #{tpu_custom_call.1} parent=11 // pred_check_branch
          %285 = sbr.rel (%p283) target = $region20
        $region19: #{tpu_custom_call.1} parent=11 // pred_region
          _
        $region20: #{tpu_custom_call.1} parent=11 // pred_fallthru
          _
        // Predicated region
        $region21: #{tpu_custom_call.1} parent=11 // pred_check
          %p286 = pneg %p134
        $region22: #{tpu_custom_call.1} parent=11 // pred_check_branch
          %288 = sbr.rel (%p286) target = $region24
        $region23: #{tpu_custom_call.1} parent=11 // pred_region
          _
        $region24: #{tpu_custom_call.1} parent=11 // pred_fallthru
          _
        // Predicated region
        $region25: #{tpu_custom_call.1} parent=11 // pred_check
          %p289 = pneg %p155
        $region26: #{tpu_custom_call.1} parent=11 // pred_check_branch
          %291 = sbr.rel (%p289) target = $region28
        $region27: #{tpu_custom_call.1} parent=11 // pred_region
          _
        $region28: #{tpu_custom_call.1} parent=11 // pred_fallthru
          _
        // Predicated region
        $region29: #{tpu_custom_call.1} parent=11 // pred_check
          %p292 = pneg %p176
        $region30: #{tpu_custom_call.1} parent=11 // pred_check_branch
          %294 = sbr.rel (%p292) target = $region32
        $region31: #{tpu_custom_call.1} parent=11 // pred_region
          _
        $region32: #{tpu_custom_call.1} parent=11 // pred_fallthru
          _
        // Predicated region
        $region33: #{tpu_custom_call.1} parent=11 // pred_check
          %p295 = pneg %p197
        $region34: #{tpu_custom_call.1} parent=11 // pred_check_branch
          %297 = sbr.rel (%p295) target = $region36
        $region35: #{tpu_custom_call.1} parent=11 // pred_region
          _
        $region36: #{tpu_custom_call.1} parent=11 // pred_fallthru
          _
        // Predicated region
        $region37: #{tpu_custom_call.1} parent=11 // pred_check
          %p298 = pneg %p218
        $region38: #{tpu_custom_call.1} parent=11 // pred_check_branch
          %300 = sbr.rel (%p298) target = $region40
        $region39: #{tpu_custom_call.1} parent=11 // pred_region
          _
        $region40: #{tpu_custom_call.1} parent=11 // pred_fallthru
          _
        // Predicated region
        $region41: #{tpu_custom_call.1} parent=11 // pred_check
          %p301 = pneg %p239
        $region42: #{tpu_custom_call.1} parent=11 // pred_check_branch
          %303 = sbr.rel (%p301) target = $region44
        $region43: #{tpu_custom_call.1} parent=11 // pred_region
          _
        $region44: #{tpu_custom_call.1} parent=11 // pred_fallthru
          _
      $region12: #{tpu_custom_call.1} parent=5 // pred_fallthru
        _
      %p304 = scmp.lt.s32.totalorder %s19, 2
      // Predicated region
      $region45: #{tpu_custom_call.1} parent=5 // pred_check
        %p305 = pneg %p304
      $region46: #{tpu_custom_call.1} parent=5 // pred_check_branch
        %307 = sbr.rel (%p305) target = $region48
      $region47: #{tpu_custom_call.1} parent=5 // pred_region
        // Predicated region
        $region49: #{tpu_custom_call.1} parent=47 // pred_check
          %p308 = pneg %p39
        $region50: #{tpu_custom_call.1} parent=47 // pred_check_branch
          %310 = sbr.rel (%p308) target = $region52
        $region51: #{tpu_custom_call.1} parent=47 // pred_region
          %p311 = scmp.lt.s32.totalorder %s19, 1
          %s312 = scalar_select %p311, %s19, 1
          %s313 = smul.addr %s312, 8
          %s314 = scalar_lea.vmem %s0, %s313
        $region52: #{tpu_custom_call.1} parent=47 // pred_fallthru
          _
        // Predicated region
        $region53: #{tpu_custom_call.1} parent=47 // pred_check
          %p315 = pneg %p65
        $region54: #{tpu_custom_call.1} parent=47 // pred_check_branch
          %317 = sbr.rel (%p315) target = $region56
        $region55: #{tpu_custom_call.1} parent=47 // pred_region
          %p318 = scmp.lt.s32.totalorder %s19, 1
          %s319 = scalar_select %p318, %s19, 1
          %s320 = smul.addr %s319, 8
          %s321 = scalar_lea.vmem %s1, %s320
        $region56: #{tpu_custom_call.1} parent=47 // pred_fallthru
          _
      $region48: #{tpu_custom_call.1} parent=5 // pred_fallthru
        _
      %p322 = scmp.le.s32.totalorder 1, %s19
      %p323 = scmp.lt.s32.totalorder %s19, 3
      %p324 = pnand %p322, %p323
      %p325 = pneg %p324
      // Predicated region
      $region57: #{tpu_custom_call.1} parent=5 // pred_check
        _
      $region58: #{tpu_custom_call.1} parent=5 // pred_check_branch
        %327 = sbr.rel (%p324) target = $region60
      $region59: #{tpu_custom_call.1} parent=5 // pred_region
        %s328 = ssub.s32 %s19, 1
        %p329 = scmp.lt.s32.totalorder %s24, 1
        %s330 = scalar_select %p329, %s24, 1
        %s331 = smul.addr %s330, 8
        %s332 = scalar_lea.vmem %s0, %s331
        %p333 = pneg %p45
        %p334 = pneg %p42
        %p335 = scmp.lt.s32.totalorder %s24, 1
        %s336 = scalar_select %p335, %s24, 1
        %s337 = smul.addr %s336, 8
        %s338 = scalar_lea.vmem %s1, %s337
        %p339 = pneg %p71
        %p340 = pneg %p68
        %p341 = pneg %p92
        %p342 = pneg %p89
        %p343 = pneg %p113
        %p344 = pneg %p110
        %p345 = pneg %p134
        %p346 = pneg %p131
        %p347 = pneg %p155
        %p348 = pneg %p152
        %p349 = pneg %p176
        %p350 = pneg %p173
        %p351 = pneg %p197
        %p352 = pneg %p194
        %p353 = pneg %p218
        %p354 = pneg %p215
        %p355 = pneg %p239
        %p356 = pneg %p236
        %p357 = pneg %p265
        %p358 = pneg %p262
        %s359 = sand.u32 %s252, 1
        %s360 = scalar_lea.sflag [#allocation3], %s359
        %s361 = sand.u32 %s252, 1
        %s362 = smul.addr %s361, 8
        %s363 = scalar_lea.vmem [#allocation2], %s362
        %p364 = scmp.lt.s32.totalorder %s24, 1
        %s365 = scalar_select %p364, %s24, 1
        %s366 = smul.addr %s365, 8
        %s367 = scalar_lea.vmem %s0, %s366
        %p368 = scmp.lt.s32.totalorder %s24, 1
        %s369 = scalar_select %p368, %s24, 1
        %s370 = smul.addr %s369, 8
        %s371 = scalar_lea.vmem %s1, %s370
        %v372 = vld [vmem:[%s367] sm:$0xff]
        %v373 = vld [vmem:[%s2] sm:$0xff]
        %v374 = vld [vmem:[%s2 + $0x8] sm:$0xff]
        %v375 = vld [vmem:[%s2 + $0x10] sm:$0xff]
        %v376 = vld [vmem:[%s2 + $0x18] sm:$0xff]
        %v377 = vld [vmem:[%s3] sm:$0x1]
        %v379 = vlaneseq
        %v380 = vshrl.u32 %v379, 7
        %v381 = vsub.s32 0, %v380
        %v382 = vrot.slane %v377, %v381
        %vm384 = vcmask 261120
        %v386 = vsel %vm384, %v372, 0
        %388 = vmatprep.subr.mxu0 0.0
        %389 = vmatpush1.msra.mxu0 %v373
        %390 = vmatprep.subr.mxu0 0.0
        %391 = vmatpush1.msra.mxu0 %v374
        %392 = vmatprep.subr.mxu0 0.0
        %393 = vmatpush1.msra.mxu0 %v375
        %394 = vmatprep.subr.mxu0 0.0
        %395 = vmatpush1.msra.mxu0 %v376
        %396 = vmatprep.subr.mxu0 0.0
        %397 = vmatpush1.msra.mxu0 0.0
        %398 = vmatprep.subr.mxu0 0.0
        %399 = vmatpush1.msra.mxu0 0.0
        %400 = vmatprep.subr.mxu0 0.0
        %401 = vmatpush1.msra.mxu0 0.0
        %402 = vmatprep.subr.mxu0 0.0
        %403 = vmatpush1.msra.mxu0 0.0
        %404 = vmatprep.subr.mxu0 0.0
        %405 = vmatpush1.msra.mxu0 0.0
        %406 = vmatprep.subr.mxu0 0.0
        %407 = vmatpush1.msra.mxu0 0.0
        %408 = vmatprep.subr.mxu0 0.0
        %409 = vmatpush1.msra.mxu0 0.0
        %410 = vmatprep.subr.mxu0 0.0
        %411 = vmatpush1.msra.mxu0 0.0
        %412 = vmatprep.subr.mxu0 0.0
        %413 = vmatpush1.msra.mxu0 0.0
        %414 = vmatprep.subr.mxu0 0.0
        %415 = vmatpush1.msra.mxu0 0.0
        %416 = vmatprep.subr.mxu0 0.0
        %417 = vmatpush1.msra.mxu0 0.0
        %418 = vmatprep.subr.mxu0 0.0
        %419 = vmatpush1.msra.mxu0 0.0
        %420 = vmatprep.subr.mxu0 0.0
        %421 = vmatpush1.msra.mxu0 0.0
        %422 = vmatprep.subr.mxu0 0.0
        %423 = vmatpush1.msra.mxu0 0.0
        %424 = vmatprep.subr.mxu0 0.0
        %425 = vmatpush1.msra.mxu0 0.0
        %426 = vmatprep.subr.mxu0 0.0
        %427 = vmatpush1.msra.mxu0 0.0
        %428 = vmatprep.subr.mxu0 0.0
        %429 = vmatpush1.msra.mxu0 0.0
        %430 = vmatprep.subr.mxu0 0.0
        %431 = vmatpush1.msra.mxu0 0.0
        %432 = vmatprep.subr.mxu0 0.0
        %433 = vmatpush1.msra.mxu0 0.0
        %434 = vmatprep.subr.mxu0 0.0
        %435 = vmatpush1.msra.mxu0 0.0
        %436 = vmatprep.subr.mxu0 0.0
        %437 = vmatpush1.msra.mxu0 0.0
        %438 = vmatprep.subr.mxu0 0.0
        %439 = vmatpush1.msra.mxu0 0.0
        %440 = vmatprep.subr.mxu0 0.0
        %441 = vmatpush1.msra.mxu0 0.0
        %442 = vmatprep.subr.mxu0 0.0
        %443 = vmatpush1.msra.mxu0 0.0
        %444 = vmatprep.subr.mxu0 0.0
        %445 = vmatpush1.msra.mxu0 0.0
        %446 = vmatprep.subr.mxu0 0.0
        %447 = vmatpush1.msra.mxu0 0.0
        %448 = vmatprep.subr.mxu0 0.0
        %449 = vmatpush1.msra.mxu0 0.0
        %450 = vmatprep.subr.mxu0 0.0
        %451 = vmatpush1.msra.mxu0 0.0
        %452 = vmatprep.mubr.f32.mxu0 0.0
        %453 = vmatmul.mubr.f32.gmra.mrb[0].mxu0 %v386
        %v454 = vpop.f32.mrb[0].mxu0
        %v455 = vadd.f32 %v382, %v454
        %v456 = vpop.f32.mrb[0].mxu0
        %457 = vdwg.mxu0
        %v458 = vld [vmem:[%s4] sm:$0xff]
        %v459 = vld [vmem:[%s4 + $0x8] sm:$0xff]
        %v460 = vld [vmem:[%s4 + $0x10] sm:$0xff]
        %v461 = vld [vmem:[%s4 + $0x18] sm:$0xff]
        %v462 = vld [vmem:[%s5] sm:$0x1]
        %v464 = vlaneseq
        %v465 = vshrl.u32 %v464, 7
        %v466 = vsub.s32 0, %v465
        %v467 = vrot.slane %v462, %v466
        %v470 = vsel %vm384, %v455, 0
        %472 = vmatprep.subr.mxu0 0.0
        %473 = vmatpush1.msra.mxu0 %v458
        %474 = vmatprep.subr.mxu0 0.0
        %475 = vmatpush1.msra.mxu0 %v459
        %476 = vmatprep.subr.mxu0 0.0
        %477 = vmatpush1.msra.mxu0 %v460
        %478 = vmatprep.subr.mxu0 0.0
        %479 = vmatpush1.msra.mxu0 %v461
        %480 = vmatprep.subr.mxu0 0.0
        %481 = vmatpush1.msra.mxu0 0.0
        %482 = vmatprep.subr.mxu0 0.0
        %483 = vmatpush1.msra.mxu0 0.0
        %484 = vmatprep.subr.mxu0 0.0
        %485 = vmatpush1.msra.mxu0 0.0
        %486 = vmatprep.subr.mxu0 0.0
        %487 = vmatpush1.msra.mxu0 0.0
        %488 = vmatprep.subr.mxu0 0.0
        %489 = vmatpush1.msra.mxu0 0.0
        %490 = vmatprep.subr.mxu0 0.0
        %491 = vmatpush1.msra.mxu0 0.0
        %492 = vmatprep.subr.mxu0 0.0
        %493 = vmatpush1.msra.mxu0 0.0
        %494 = vmatprep.subr.mxu0 0.0
        %495 = vmatpush1.msra.mxu0 0.0
        %496 = vmatprep.subr.mxu0 0.0
        %497 = vmatpush1.msra.mxu0 0.0
        %498 = vmatprep.subr.mxu0 0.0
        %499 = vmatpush1.msra.mxu0 0.0
        %500 = vmatprep.subr.mxu0 0.0
        %501 = vmatpush1.msra.mxu0 0.0
        %502 = vmatprep.subr.mxu0 0.0
        %503 = vmatpush1.msra.mxu0 0.0
        %504 = vmatprep.subr.mxu0 0.0
        %505 = vmatpush1.msra.mxu0 0.0
        %506 = vmatprep.subr.mxu0 0.0
        %507 = vmatpush1.msra.mxu0 0.0
        %508 = vmatprep.subr.mxu0 0.0
        %509 = vmatpush1.msra.mxu0 0.0
        %510 = vmatprep.subr.mxu0 0.0
        %511 = vmatpush1.msra.mxu0 0.0
        %512 = vmatprep.subr.mxu0 0.0
        %513 = vmatpush1.msra.mxu0 0.0
        %514 = vmatprep.subr.mxu0 0.0
        %515 = vmatpush1.msra.mxu0 0.0
        %516 = vmatprep.subr.mxu0 0.0
        %517 = vmatpush1.msra.mxu0 0.0
        %518 = vmatprep.subr.mxu0 0.0
        %519 = vmatpush1.msra.mxu0 0.0
        %520 = vmatprep.subr.mxu0 0.0
        %521 = vmatpush1.msra.mxu0 0.0
        %522 = vmatprep.subr.mxu0 0.0
        %523 = vmatpush1.msra.mxu0 0.0
        %524 = vmatprep.subr.mxu0 0.0
        %525 = vmatpush1.msra.mxu0 0.0
        %526 = vmatprep.subr.mxu0 0.0
        %527 = vmatpush1.msra.mxu0 0.0
        %528 = vmatprep.subr.mxu0 0.0
        %529 = vmatpush1.msra.mxu0 0.0
        %530 = vmatprep.subr.mxu0 0.0
        %531 = vmatpush1.msra.mxu0 0.0
        %532 = vmatprep.subr.mxu0 0.0
        %533 = vmatpush1.msra.mxu0 0.0
        %534 = vmatprep.subr.mxu0 0.0
        %535 = vmatpush1.msra.mxu0 0.0
        %536 = vmatprep.mubr.f32.mxu0 0.0
        %537 = vmatmul.mubr.f32.gmra.mrb[0].mxu0 %v470
        %v538 = vpop.f32.mrb[0].mxu0
        %v539 = vadd.f32 %v467, %v538
        %v540 = vpop.f32.mrb[0].mxu0
        %541 = vdwg.mxu0
        %v542 = vmax.f32 %v539, 0.0
        %v543 = vld [vmem:[%s6] sm:$0xff]
        %v544 = vld [vmem:[%s6 + $0x8] sm:$0xff]
        %v545 = vld [vmem:[%s6 + $0x10] sm:$0xff]
        %v546 = vld [vmem:[%s6 + $0x18] sm:$0xff]
        %v547 = vld [vmem:[%s6 + $0x20] sm:$0xff]
        %v548 = vld [vmem:[%s6 + $0x28] sm:$0xff]
        %v549 = vld [vmem:[%s6 + $0x30] sm:$0xff]
        %v550 = vld [vmem:[%s6 + $0x38] sm:$0xff]
        %v551 = vld [vmem:[%s6 + $0x40] sm:$0xff]
        %v552 = vld [vmem:[%s6 + $0x48] sm:$0xff]
        %v553 = vld [vmem:[%s6 + $0x50] sm:$0xff]
        %v554 = vld [vmem:[%s6 + $0x58] sm:$0xff]
        %v555 = vld [vmem:[%s6 + $0x60] sm:$0xff]
        %v556 = vld [vmem:[%s6 + $0x68] sm:$0xff]
        %v557 = vld [vmem:[%s6 + $0x70] sm:$0xff]
        %v558 = vld [vmem:[%s6 + $0x78] sm:$0xff]
        %v559 = vld [vmem:[%s7] sm:$0x1]
        %v561 = vlaneseq
        %v562 = vshrl.u32 %v561, 7
        %v563 = vsub.s32 0, %v562
        %v564 = vrot.slane %v559, %v563
        %566 = vmatprep.subr.mxu0 0.0
        %567 = vmatpush1.msra.mxu0 %v543
        %568 = vmatprep.subr.mxu0 0.0
        %569 = vmatpush1.msra.mxu0 %v544
        %570 = vmatprep.subr.mxu0 0.0
        %571 = vmatpush1.msra.mxu0 %v545
        %572 = vmatprep.subr.mxu0 0.0
        %573 = vmatpush1.msra.mxu0 %v546
        %574 = vmatprep.subr.mxu0 0.0
        %575 = vmatpush1.msra.mxu0 %v547
        %576 = vmatprep.subr.mxu0 0.0
        %577 = vmatpush1.msra.mxu0 %v548
        %578 = vmatprep.subr.mxu0 0.0
        %579 = vmatpush1.msra.mxu0 %v549
        %580 = vmatprep.subr.mxu0 0.0
        %581 = vmatpush1.msra.mxu0 %v550
        %582 = vmatprep.subr.mxu0 0.0
        %583 = vmatpush1.msra.mxu0 %v551
        %584 = vmatprep.subr.mxu0 0.0
        %585 = vmatpush1.msra.mxu0 %v552
        %586 = vmatprep.subr.mxu0 0.0
        %587 = vmatpush1.msra.mxu0 %v553
        %588 = vmatprep.subr.mxu0 0.0
        %589 = vmatpush1.msra.mxu0 %v554
        %590 = vmatprep.subr.mxu0 0.0
        %591 = vmatpush1.msra.mxu0 %v555
        %592 = vmatprep.subr.mxu0 0.0
        %593 = vmatpush1.msra.mxu0 %v556
        %594 = vmatprep.subr.mxu0 0.0
        %595 = vmatpush1.msra.mxu0 %v557
        %596 = vmatprep.subr.mxu0 0.0
        %597 = vmatpush1.msra.mxu0 %v558
        %598 = vmatprep.subr.mxu0 0.0
        %599 = vmatpush1.msra.mxu0 0.0
        %600 = vmatprep.subr.mxu0 0.0
        %601 = vmatpush1.msra.mxu0 0.0
        %602 = vmatprep.subr.mxu0 0.0
        %603 = vmatpush1.msra.mxu0 0.0
        %604 = vmatprep.subr.mxu0 0.0
        %605 = vmatpush1.msra.mxu0 0.0
        %606 = vmatprep.subr.mxu0 0.0
        %607 = vmatpush1.msra.mxu0 0.0
        %608 = vmatprep.subr.mxu0 0.0
        %609 = vmatpush1.msra.mxu0 0.0
        %610 = vmatprep.subr.mxu0 0.0
        %611 = vmatpush1.msra.mxu0 0.0
        %612 = vmatprep.subr.mxu0 0.0
        %613 = vmatpush1.msra.mxu0 0.0
        %614 = vmatprep.subr.mxu0 0.0
        %615 = vmatpush1.msra.mxu0 0.0
        %616 = vmatprep.subr.mxu0 0.0
        %617 = vmatpush1.msra.mxu0 0.0
        %618 = vmatprep.subr.mxu0 0.0
        %619 = vmatpush1.msra.mxu0 0.0
        %620 = vmatprep.subr.mxu0 0.0
        %621 = vmatpush1.msra.mxu0 0.0
        %622 = vmatprep.subr.mxu0 0.0
        %623 = vmatpush1.msra.mxu0 0.0
        %624 = vmatprep.subr.mxu0 0.0
        %625 = vmatpush1.msra.mxu0 0.0
        %626 = vmatprep.subr.mxu0 0.0
        %627 = vmatpush1.msra.mxu0 0.0
        %628 = vmatprep.subr.mxu0 0.0
        %629 = vmatpush1.msra.mxu0 0.0
        %630 = vmatprep.mubr.f32.mxu0 0.0
        %631 = vmatmul.mubr.f32.gmra.mrb[0].mxu0 %v542
        %v632 = vpop.f32.mrb[0].mxu0
        %v633 = vadd.f32 %v564, %v632
        %v634 = vpop.f32.mrb[0].mxu0
        %635 = vdwg.mxu0
        %v636 = vadd.f32 %v455, %v633
        %v637 = vld [vmem:[%s371] sm:$0xff]
        %v638 = vadd.f32 %v636, %v637
        %v639 = vsel %vm384, %v638, 0.0
        %640 = vadd.xlane.f32.xlu0 %v639
        %v641 = vpop.xlane.xlu0 %640
        %v642 = vrcp.pop 32.0
        %v643 = vmul.f32 %v641, %v642
        %v644 = vmul.f32 %v638, %v638
        %v645 = vsel %vm384, %v644, 0.0
        %646 = vadd.xlane.f32.xlu0 %v645
        %v647 = vpop.xlane.xlu0 %646
        %v648 = vmul.f32 %v647, %v642
        %v649 = vmul.f32 %v643, %v643
        %v650 = vsub.f32 %v648, %v649
        %v651 = vmax.f32 %v650, 0.0
        %v652 = vsub.f32 %v638, %v643
        %v653 = vadd.f32 %v651, 1e-12
        %v654 = vrsqrt.pop %v653
        %v655 = vmul.f32 %v652, %v654
        %v656 = vld [vmem:[%s8] sm:$0x1]
        %v658 = vlaneseq
        %v659 = vshrl.u32 %v658, 7
        %v660 = vsub.s32 0, %v659
        %v661 = vrot.slane %v656, %v660
        %v663 = vmul.f32 %v655, %v661
        %v664 = vld [vmem:[%s9] sm:$0x1]
        %v666 = vlaneseq
        %v667 = vshrl.u32 %v666, 7
        %v668 = vsub.s32 0, %v667
        %v669 = vrot.slane %v664, %v668
        %v671 = vadd.f32 %v663, %v669
        %672 = vst.msk [vmem:[%s363] sm:$0xff] %vm384, %v671
        %s673 = sand.u32 %s252, 1
        %s674 = scalar_lea.sflag [#allocation3], %s673
        %s675 = sand.u32 %s252, 1
        %s676 = smul.addr %s675, 8
        %s677 = scalar_lea.vmem [#allocation2], %s676
        // Predicated region
        $region61: #{tpu_custom_call.1} parent=59 // pred_check
          %p678 = pneg %p262
        $region62: #{tpu_custom_call.1} parent=59 // pred_check_branch
          %680 = sbr.rel (%p678) target = $region64
        $region63: #{tpu_custom_call.1} parent=59 // pred_region
          %s682 = ssub.s32 128, 128
          %683 = vsyncadd %s674, %s682
          %s684 = smul.addr %s24, 128
          %s685 = scalar_lea.hbm %s10, %s684
          %s687 = sshll.u32 %s677, 4
          %s688 = int_to_ptr.vmem [resolvable:$true] %s687
          %690 = dma.vmem_to_hbm [thread:$0]  %s688, 128, %s685, %s674
        $region64: #{tpu_custom_call.1} parent=59 // pred_fallthru
          _
      $region60: #{tpu_custom_call.1} parent=5 // pred_fallthru
        _
      %p691 = scmp.le.s32.totalorder 2, %s19
      // Predicated region
      $region65: #{tpu_custom_call.1} parent=5 // pred_check
        %p692 = pneg %p691
      $region66: #{tpu_custom_call.1} parent=5 // pred_check_branch
        %694 = sbr.rel (%p692) target = $region68
      $region67: #{tpu_custom_call.1} parent=5 // pred_region
        %s695 = ssub.s32 %s19, 2
        // Predicated region
        $region69: #{tpu_custom_call.1} parent=67 // pred_check
          %p696 = pneg %p268
        $region70: #{tpu_custom_call.1} parent=67 // pred_check_branch
          %698 = sbr.rel (%p696) target = $region72
        $region71: #{tpu_custom_call.1} parent=67 // pred_region
          %s699 = sand.u32 %s253, 1
          %s700 = scalar_lea.sflag [#allocation3], %s699
          %s701 = sand.u32 %s253, 1
          %s702 = smul.addr %s701, 8
          %s703 = scalar_lea.vmem [#allocation2], %s702
          %704 = dma.done %s700, 128
        $region72: #{tpu_custom_call.1} parent=67 // pred_fallthru
          _
      $region68: #{tpu_custom_call.1} parent=5 // pred_fallthru
        _
    $region6: #{tpu_custom_call.1} parent=1 // loop_footer
      %s23 = sadd.s32 1, %s19
    $region7: #{tpu_custom_call.1} parent=1 // loop_footer_branch
      %18 = sbr.rel target = $region3
    $region8: #{tpu_custom_call.1} parent=1 // loop_exit
      _
    %705 = vsyncpa [#allocation3], 1
    %s706 = scalar_lea.sflag [#allocation3], 1
    %707 = vsyncpa %s706, 1

// kernel: tpu_custom_call.1
$region0: #{tpu_custom_call.1}
  #allocation0 [shape = 'u32[]', space=smem, size = 0x4, offset = 0x4, fixed_abs, tag = 'smem constant byte address 0x4 - core index']
  #allocation1 [shape = 'u32[144,128]{1,0:T(1,128)}', space=vmem, size = 0x12000, scoped, tag = 'internal scratch']
  %s0 = inlined_call_operand.vmem [shape: f32[16,32], index: 0, kind: input, shape index: {}]
  %s1 = inlined_call_operand.vmem [shape: f32[16,32], index: 1, kind: input, shape index: {}]
  %s2 = inlined_call_operand.vmem [shape: f32[32,32], index: 2, kind: input, shape index: {}]
  %s3 = inlined_call_operand.vmem [shape: f32[1,32], index: 3, kind: input, shape index: {}]
  %s4 = inlined_call_operand.vmem [shape: f32[32,128], index: 4, kind: input, shape index: {}]
  %s5 = inlined_call_operand.vmem [shape: f32[1,128], index: 5, kind: input, shape index: {}]
  %s6 = inlined_call_operand.vmem [shape: f32[128,32], index: 6, kind: input, shape index: {}]
  %s7 = inlined_call_operand.vmem [shape: f32[1,32], index: 7, kind: input, shape index: {}]
  %s8 = inlined_call_operand.vmem [shape: f32[1,32], index: 8, kind: input, shape index: {}]
  %s9 = inlined_call_operand.vmem [shape: f32[1,32], index: 9, kind: input, shape index: {}]
  %s10 = inlined_call_operand.hbm [shape: f32[16,32], index: 10, kind: output, shape index: {}]
  %s11 = sld [smem:[#allocation0]]
  $region73: #{tpu_custom_call.1} parent=0
    _
  %s13 = ssub.s32 1, %s11
  %s14 = scalar_select 0, %s13, %s11
  $region1: #{tpu_custom_call.1} parent=0
    #allocation2 [shape = 'u8[8192]{0}', space=vmem, size = 0x2000, scoped, tag = 'output window, operand 0']
    #allocation3 [shape = 's32[2]{0}', space=sflag, size = 0x8, scoped, tag = 'scoped memory for tpu_custom_call.1']
    %15 = vsyncpa [#allocation3], 0
    %s16 = scalar_lea.sflag [#allocation3], 1
    %17 = vsyncpa %s16, 0
    loop: start=0, step=1, limit=4
    $region2: #{tpu_custom_call.1} parent=1 // loop_pre_header
      _
    $region3: #{tpu_custom_call.1} parent=1 // loop_header
      %s19 = sphi 0, %s23
      %p20 = scmp.ge.s32.totalorder %s19, 4
      %s29 = sphi 0, %s31
      %s32 = sphi 0, %s29
      %s33 = sphi 0, %s32
      %s49 = sphi 0, %s33
      %s55 = sphi 0, %s57
      %s58 = sphi 0, %s55
      %s59 = sphi 0, %s58
      %s75 = sphi 0, %s59
      %s79 = sphi 0, %s79
      %s81 = sphi 0, %s79
      %s82 = sphi 0, %s81
      %s96 = sphi 0, %s82
      %s100 = sphi 0, %s100
      %s102 = sphi 0, %s100
      %s103 = sphi 0, %s102
      %s117 = sphi 0, %s103
      %s121 = sphi 0, %s121
      %s123 = sphi 0, %s121
      %s124 = sphi 0, %s123
      %s138 = sphi 0, %s124
      %s142 = sphi 0, %s142
      %s144 = sphi 0, %s142
      %s145 = sphi 0, %s144
      %s159 = sphi 0, %s145
      %s163 = sphi 0, %s163
      %s165 = sphi 0, %s163
      %s166 = sphi 0, %s165
      %s180 = sphi 0, %s166
      %s184 = sphi 0, %s184
      %s186 = sphi 0, %s184
      %s187 = sphi 0, %s186
      %s201 = sphi 0, %s187
      %s205 = sphi 0, %s205
      %s207 = sphi 0, %s205
      %s208 = sphi 0, %s207
      %s222 = sphi 0, %s208
      %s226 = sphi 0, %s226
      %s228 = sphi 0, %s226
      %s229 = sphi 0, %s228
      %s243 = sphi 0, %s229
      %s249 = sphi 0, %s251
      %s252 = sphi 0, %s249
      %s253 = sphi 0, %s252
      %s269 = sphi 0, %s253
    $region4: #{tpu_custom_call.1} parent=1 // loop_header_branch
      %22 = sbr.rel (%p20) target = $region8
    $region5: #{tpu_custom_call.1} parent=1 // loop_body
      %s24 = ssub.s32 %s19, 1
      %s25 = ssub.s32 %s19, 2
      %s26 = sadd.s32 %s19, 1
      %s27 = ssub.s32 %s19, %s26
      %p28 = scmp.eq.s32.totalorder %s27, 0
      %s30 = sadd.s32 %s29, 1
      %s31 = scalar_select %p28, %s29, %s30
      %p34 = pneg %p28
      %p35 = scmp.eq.s32.totalorder %s19, 1
      %p36 = por %p34, %p35
      %p37 = scmp.ne.s32.totalorder %s29, %s32
      %p38 = scmp.eq.s32.totalorder %s19, 0
      %p39 = por %p37, %p38
      %p40 = scmp.ne.s32.totalorder %s29, %s32
      %p41 = scmp.eq.s32.totalorder %s24, 1
      %p42 = por %p40, %p41
      %p43 = scmp.ne.s32.totalorder %s32, %s33
      %p44 = scmp.eq.s32.totalorder %s24, 0
      %p45 = por %p43, %p44
      %p46 = scmp.ne.s32.totalorder %s32, %s33
      %p47 = scmp.eq.s32.totalorder %s25, 1
      %p48 = por %p46, %p47
      %p50 = scmp.ne.s32.totalorder %s33, %s49
      %p51 = scmp.eq.s32.totalorder %s25, 0
      %p52 = por %p50, %p51
      %s53 = ssub.s32 %s19, %s26
      %p54 = scmp.eq.s32.totalorder %s53, 0
      %s56 = sadd.s32 %s55, 1
      %s57 = scalar_select %p54, %s55, %s56
      %p60 = pneg %p54
      %p61 = scmp.eq.s32.totalorder %s19, 1
      %p62 = por %p60, %p61
      %p63 = scmp.ne.s32.totalorder %s55, %s58
      %p64 = scmp.eq.s32.totalorder %s19, 0
      %p65 = por %p63, %p64
      %p66 = scmp.ne.s32.totalorder %s55, %s58
      %p67 = scmp.eq.s32.totalorder %s24, 1
      %p68 = por %p66, %p67
      %p69 = scmp.ne.s32.totalorder %s58, %s59
      %p70 = scmp.eq.s32.totalorder %s24, 0
      %p71 = por %p69, %p70
      %p72 = scmp.ne.s32.totalorder %s58, %s59
      %p73 = scmp.eq.s32.totalorder %s25, 1
      %p74 = por %p72, %p73
      %p76 = scmp.ne.s32.totalorder %s59, %s75
      %p77 = scmp.eq.s32.totalorder %s25, 0
      %p78 = por %p76, %p77
      %s80 = sadd.s32 %s79, 1
      %p83 = scmp.eq.s32.totalorder %s19, 1
      %p84 = scmp.ne.s32.totalorder %s79, %s81
      %p85 = scmp.eq.s32.totalorder %s19, 0
      %p86 = por %p84, %p85
      %p87 = scmp.ne.s32.totalorder %s79, %s81
      %p88 = scmp.eq.s32.totalorder %s24, 1
      %p89 = por %p87, %p88
      %p90 = scmp.ne.s32.totalorder %s81, %s82
      %p91 = scmp.eq.s32.totalorder %s24, 0
      %p92 = por %p90, %p91
      %p93 = scmp.ne.s32.totalorder %s81, %s82
      %p94 = scmp.eq.s32.totalorder %s25, 1
      %p95 = por %p93, %p94
      %p97 = scmp.ne.s32.totalorder %s82, %s96
      %p98 = scmp.eq.s32.totalorder %s25, 0
      %p99 = por %p97, %p98
      %s101 = sadd.s32 %s100, 1
      %p104 = scmp.eq.s32.totalorder %s19, 1
      %p105 = scmp.ne.s32.totalorder %s100, %s102
      %p106 = scmp.eq.s32.totalorder %s19, 0
      %p107 = por %p105, %p106
      %p108 = scmp.ne.s32.totalorder %s100, %s102
      %p109 = scmp.eq.s32.totalorder %s24, 1
      %p110 = por %p108, %p109
      %p111 = scmp.ne.s32.totalorder %s102, %s103
      %p112 = scmp.eq.s32.totalorder %s24, 0
      %p113 = por %p111, %p112
      %p114 = scmp.ne.s32.totalorder %s102, %s103
      %p115 = scmp.eq.s32.totalorder %s25, 1
      %p116 = por %p114, %p115
      %p118 = scmp.ne.s32.totalorder %s103, %s117
      %p119 = scmp.eq.s32.totalorder %s25, 0
      %p120 = por %p118, %p119
      %s122 = sadd.s32 %s121, 1
      %p125 = scmp.eq.s32.totalorder %s19, 1
      %p126 = scmp.ne.s32.totalorder %s121, %s123
      %p127 = scmp.eq.s32.totalorder %s19, 0
      %p128 = por %p126, %p127
      %p129 = scmp.ne.s32.totalorder %s121, %s123
      %p130 = scmp.eq.s32.totalorder %s24, 1
      %p131 = por %p129, %p130
      %p132 = scmp.ne.s32.totalorder %s123, %s124
      %p133 = scmp.eq.s32.totalorder %s24, 0
      %p134 = por %p132, %p133
      %p135 = scmp.ne.s32.totalorder %s123, %s124
      %p136 = scmp.eq.s32.totalorder %s25, 1
      %p137 = por %p135, %p136
      %p139 = scmp.ne.s32.totalorder %s124, %s138
      %p140 = scmp.eq.s32.totalorder %s25, 0
      %p141 = por %p139, %p140
      %s143 = sadd.s32 %s142, 1
      %p146 = scmp.eq.s32.totalorder %s19, 1
      %p147 = scmp.ne.s32.totalorder %s142, %s144
      %p148 = scmp.eq.s32.totalorder %s19, 0
      %p149 = por %p147, %p148
      %p150 = scmp.ne.s32.totalorder %s142, %s144
      %p151 = scmp.eq.s32.totalorder %s24, 1
      %p152 = por %p150, %p151
      %p153 = scmp.ne.s32.totalorder %s144, %s145
      %p154 = scmp.eq.s32.totalorder %s24, 0
      %p155 = por %p153, %p154
      %p156 = scmp.ne.s32.totalorder %s144, %s145
      %p157 = scmp.eq.s32.totalorder %s25, 1
      %p158 = por %p156, %p157
      %p160 = scmp.ne.s32.totalorder %s145, %s159
      %p161 = scmp.eq.s32.totalorder %s25, 0
      %p162 = por %p160, %p161
      %s164 = sadd.s32 %s163, 1
      %p167 = scmp.eq.s32.totalorder %s19, 1
      %p168 = scmp.ne.s32.totalorder %s163, %s165
      %p169 = scmp.eq.s32.totalorder %s19, 0
      %p170 = por %p168, %p169
      %p171 = scmp.ne.s32.totalorder %s163, %s165
      %p172 = scmp.eq.s32.totalorder %s24, 1
      %p173 = por %p171, %p172
      %p174 = scmp.ne.s32.totalorder %s165, %s166
      %p175 = scmp.eq.s32.totalorder %s24, 0
      %p176 = por %p174, %p175
      %p177 = scmp.ne.s32.totalorder %s165, %s166
      %p178 = scmp.eq.s32.totalorder %s25, 1
      %p179 = por %p177, %p178
      %p181 = scmp.ne.s32.totalorder %s166, %s180
      %p182 = scmp.eq.s32.totalorder %s25, 0
      %p183 = por %p181, %p182
      %s185 = sadd.s32 %s184, 1
      %p188 = scmp.eq.s32.totalorder %s19, 1
      %p189 = scmp.ne.s32.totalorder %s184, %s186
      %p190 = scmp.eq.s32.totalorder %s19, 0
      %p191 = por %p189, %p190
      %p192 = scmp.ne.s32.totalorder %s184, %s186
      %p193 = scmp.eq.s32.totalorder %s24, 1
      %p194 = por %p192, %p193
      %p195 = scmp.ne.s32.totalorder %s186, %s187
      %p196 = scmp.eq.s32.totalorder %s24, 0
      %p197 = por %p195, %p196
      %p198 = scmp.ne.s32.totalorder %s186, %s187
      %p199 = scmp.eq.s32.totalorder %s25, 1
      %p200 = por %p198, %p199
      %p202 = scmp.ne.s32.totalorder %s187, %s201
      %p203 = scmp.eq.s32.totalorder %s25, 0
      %p204 = por %p202, %p203
      %s206 = sadd.s32 %s205, 1
      %p209 = scmp.eq.s32.totalorder %s19, 1
      %p210 = scmp.ne.s32.totalorder %s205, %s207
      %p211 = scmp.eq.s32.totalorder %s19, 0
      %p212 = por %p210, %p211
      %p213 = scmp.ne.s32.totalorder %s205, %s207
      %p214 = scmp.eq.s32.totalorder %s24, 1
      %p215 = por %p213, %p214
      %p216 = scmp.ne.s32.totalorder %s207, %s208
      %p217 = scmp.eq.s32.totalorder %s24, 0
      %p218 = por %p216, %p217
      %p219 = scmp.ne.s32.totalorder %s207, %s208
      %p220 = scmp.eq.s32.totalorder %s25, 1
      %p221 = por %p219, %p220
      %p223 = scmp.ne.s32.totalorder %s208, %s222
      %p224 = scmp.eq.s32.totalorder %s25, 0
      %p225 = por %p223, %p224
      %s227 = sadd.s32 %s226, 1
      %p230 = scmp.eq.s32.totalorder %s19, 1
      %p231 = scmp.ne.s32.totalorder %s226, %s228
      %p232 = scmp.eq.s32.totalorder %s19, 0
      %p233 = por %p231, %p232
      %p234 = scmp.ne.s32.totalorder %s226, %s228
      %p235 = scmp.eq.s32.totalorder %s24, 1
      %p236 = por %p234, %p235
      %p237 = scmp.ne.s32.totalorder %s228, %s229
      %p238 = scmp.eq.s32.totalorder %s24, 0
      %p239 = por %p237, %p238
      %p240 = scmp.ne.s32.totalorder %s228, %s229
      %p241 = scmp.eq.s32.totalorder %s25, 1
      %p242 = por %p240, %p241
      %p244 = scmp.ne.s32.totalorder %s229, %s243
      %p245 = scmp.eq.s32.totalorder %s25, 0
      %p246 = por %p244, %p245
      %s247 = ssub.s32 %s19, %s26
      %p248 = scmp.eq.s32.totalorder %s247, 0
      %s250 = sadd.s32 %s249, 1
      %s251 = scalar_select %p248, %s249, %s250
      %p254 = pneg %p248
      %p255 = scmp.eq.s32.totalorder %s19, 1
      %p256 = por %p254, %p255
      %p257 = scmp.ne.s32.totalorder %s249, %s252
      %p258 = scmp.eq.s32.totalorder %s19, 0
      %p259 = por %p257, %p258
      %p260 = scmp.ne.s32.totalorder %s249, %s252
      %p261 = scmp.eq.s32.totalorder %s24, 1
      %p262 = por %p260, %p261
      %p263 = scmp.ne.s32.totalorder %s252, %s253
      %p264 = scmp.eq.s32.totalorder %s24, 0
      %p265 = por %p263, %p264
      %p266 = scmp.ne.s32.totalorder %s252, %s253
      %p267 = scmp.eq.s32.totalorder %s25, 1
      %p268 = por %p266, %p267
      %p270 = scmp.ne.s32.totalorder %s253, %s269
      %p271 = scmp.eq.s32.totalorder %s25, 0
      %p272 = por %p270, %p271
      %p273 = scmp.le.s32.totalorder 1, %s19
      %p274 = scmp.lt.s32.totalorder %s19, 3
      %p275 = pnand %p273, %p274
      %p276 = pneg %p275
      // Predicated region
      $region9: #{tpu_custom_call.1} parent=5 // pred_check
        _
      $region10: #{tpu_custom_call.1} parent=5 // pred_check_branch
        %278 = sbr.rel (%p275) target = $region12
      $region11: #{tpu_custom_call.1} parent=5 // pred_region
        %s279 = ssub.s32 %s19, 1
        // Predicated region
        $region13: #{tpu_custom_call.1} parent=11 // pred_check
          %p280 = pneg %p92
        $region14: #{tpu_custom_call.1} parent=11 // pred_check_branch
          %282 = sbr.rel (%p280) target = $region16
        $region15: #{tpu_custom_call.1} parent=11 // pred_region
          _
        $region16: #{tpu_custom_call.1} parent=11 // pred_fallthru
          _
        // Predicated region
        $region17: #{tpu_custom_call.1} parent=11 // pred_check
          %p283 = pneg %p113
        $region18: #{tpu_custom_call.1} parent=11 // pred_check_branch
          %285 = sbr.rel (%p283) target = $region20
        $region19: #{tpu_custom_call.1} parent=11 // pred_region
          _
        $region20: #{tpu_custom_call.1} parent=11 // pred_fallthru
          _
        // Predicated region
        $region21: #{tpu_custom_call.1} parent=11 // pred_check
          %p286 = pneg %p134
        $region22: #{tpu_custom_call.1} parent=11 // pred_check_branch
          %288 = sbr.rel (%p286) target = $region24
        $region23: #{tpu_custom_call.1} parent=11 // pred_region
          _
        $region24: #{tpu_custom_call.1} parent=11 // pred_fallthru
          _
        // Predicated region
        $region25: #{tpu_custom_call.1} parent=11 // pred_check
          %p289 = pneg %p155
        $region26: #{tpu_custom_call.1} parent=11 // pred_check_branch
          %291 = sbr.rel (%p289) target = $region28
        $region27: #{tpu_custom_call.1} parent=11 // pred_region
          _
        $region28: #{tpu_custom_call.1} parent=11 // pred_fallthru
          _
        // Predicated region
        $region29: #{tpu_custom_call.1} parent=11 // pred_check
          %p292 = pneg %p176
        $region30: #{tpu_custom_call.1} parent=11 // pred_check_branch
          %294 = sbr.rel (%p292) target = $region32
        $region31: #{tpu_custom_call.1} parent=11 // pred_region
          _
        $region32: #{tpu_custom_call.1} parent=11 // pred_fallthru
          _
        // Predicated region
        $region33: #{tpu_custom_call.1} parent=11 // pred_check
          %p295 = pneg %p197
        $region34: #{tpu_custom_call.1} parent=11 // pred_check_branch
          %297 = sbr.rel (%p295) target = $region36
        $region35: #{tpu_custom_call.1} parent=11 // pred_region
          _
        $region36: #{tpu_custom_call.1} parent=11 // pred_fallthru
          _
        // Predicated region
        $region37: #{tpu_custom_call.1} parent=11 // pred_check
          %p298 = pneg %p218
        $region38: #{tpu_custom_call.1} parent=11 // pred_check_branch
          %300 = sbr.rel (%p298) target = $region40
        $region39: #{tpu_custom_call.1} parent=11 // pred_region
          _
        $region40: #{tpu_custom_call.1} parent=11 // pred_fallthru
          _
        // Predicated region
        $region41: #{tpu_custom_call.1} parent=11 // pred_check
          %p301 = pneg %p239
        $region42: #{tpu_custom_call.1} parent=11 // pred_check_branch
          %303 = sbr.rel (%p301) target = $region44
        $region43: #{tpu_custom_call.1} parent=11 // pred_region
          _
        $region44: #{tpu_custom_call.1} parent=11 // pred_fallthru
          _
      $region12: #{tpu_custom_call.1} parent=5 // pred_fallthru
        _
      %p304 = scmp.lt.s32.totalorder %s19, 2
      // Predicated region
      $region45: #{tpu_custom_call.1} parent=5 // pred_check
        %p305 = pneg %p304
      $region46: #{tpu_custom_call.1} parent=5 // pred_check_branch
        %307 = sbr.rel (%p305) target = $region48
      $region47: #{tpu_custom_call.1} parent=5 // pred_region
        // Predicated region
        $region49: #{tpu_custom_call.1} parent=47 // pred_check
          %p308 = pneg %p39
        $region50: #{tpu_custom_call.1} parent=47 // pred_check_branch
          %310 = sbr.rel (%p308) target = $region52
        $region51: #{tpu_custom_call.1} parent=47 // pred_region
          %p311 = scmp.lt.s32.totalorder %s19, 1
          %s312 = scalar_select %p311, %s19, 1
          %s313 = smul.addr %s312, 8
          %s314 = scalar_lea.vmem %s0, %s313
        $region52: #{tpu_custom_call.1} parent=47 // pred_fallthru
          _
        // Predicated region
        $region53: #{tpu_custom_call.1} parent=47 // pred_check
          %p315 = pneg %p65
        $region54: #{tpu_custom_call.1} parent=47 // pred_check_branch
          %317 = sbr.rel (%p315) target = $region56
        $region55: #{tpu_custom_call.1} parent=47 // pred_region
          %p318 = scmp.lt.s32.totalorder %s19, 1
          %s319 = scalar_select %p318, %s19, 1
          %s320 = smul.addr %s319, 8
          %s321 = scalar_lea.vmem %s1, %s320
        $region56: #{tpu_custom_call.1} parent=47 // pred_fallthru
          _
      $region48: #{tpu_custom_call.1} parent=5 // pred_fallthru
        _
      %p322 = scmp.le.s32.totalorder 1, %s19
      %p323 = scmp.lt.s32.totalorder %s19, 3
      %p324 = pnand %p322, %p323
      %p325 = pneg %p324
      // Predicated region
      $region57: #{tpu_custom_call.1} parent=5 // pred_check
        _
      $region58: #{tpu_custom_call.1} parent=5 // pred_check_branch
        %327 = sbr.rel (%p324) target = $region60
      $region59: #{tpu_custom_call.1} parent=5 // pred_region
        %s328 = ssub.s32 %s19, 1
        %p329 = scmp.lt.s32.totalorder %s24, 1
        %s330 = scalar_select %p329, %s24, 1
        %s331 = smul.addr %s330, 8
        %s332 = scalar_lea.vmem %s0, %s331
        %p333 = pneg %p45
        %p334 = pneg %p42
        %p335 = scmp.lt.s32.totalorder %s24, 1
        %s336 = scalar_select %p335, %s24, 1
        %s337 = smul.addr %s336, 8
        %s338 = scalar_lea.vmem %s1, %s337
        %p339 = pneg %p71
        %p340 = pneg %p68
        %p341 = pneg %p92
        %p342 = pneg %p89
        %p343 = pneg %p113
        %p344 = pneg %p110
        %p345 = pneg %p134
        %p346 = pneg %p131
        %p347 = pneg %p155
        %p348 = pneg %p152
        %p349 = pneg %p176
        %p350 = pneg %p173
        %p351 = pneg %p197
        %p352 = pneg %p194
        %p353 = pneg %p218
        %p354 = pneg %p215
        %p355 = pneg %p239
        %p356 = pneg %p236
        %p357 = pneg %p265
        %p358 = pneg %p262
        %s359 = sand.u32 %s252, 1
        %s360 = scalar_lea.sflag [#allocation3], %s359
        %s361 = sand.u32 %s252, 1
        %s362 = smul.addr %s361, 8
        %s363 = scalar_lea.vmem [#allocation2], %s362
        %p364 = scmp.lt.s32.totalorder %s24, 1
        %s365 = scalar_select %p364, %s24, 1
        %s366 = smul.addr %s365, 8
        %s367 = scalar_lea.vmem %s0, %s366
        %p368 = scmp.lt.s32.totalorder %s24, 1
        %s369 = scalar_select %p368, %s24, 1
        %s370 = smul.addr %s369, 8
        %s371 = scalar_lea.vmem %s1, %s370
        %v372 = vld [vmem:[%s367] sm:$0xff]
        %v373 = vld [vmem:[%s2] sm:$0xff]
        %v374 = vld [vmem:[%s2 + $0x8] sm:$0xff]
        %v375 = vld [vmem:[%s2 + $0x10] sm:$0xff]
        %v376 = vld [vmem:[%s2 + $0x18] sm:$0xff]
        %v377 = vld [vmem:[%s3] sm:$0x1]
        %v379 = vlaneseq
        %v380 = vshrl.u32 %v379, 7
        %v381 = vsub.s32 0, %v380
        %v382 = vrot.slane %v377, %v381
        %vm384 = vcmask 261120
        %v386 = vsel %vm384, %v372, 0
        %388 = vmatprep.subr.mxu0 0.0
        %389 = vmatpush1.msra.mxu0 %v373
        %390 = vmatprep.subr.mxu0 0.0
        %391 = vmatpush1.msra.mxu0 %v374
        %392 = vmatprep.subr.mxu0 0.0
        %393 = vmatpush1.msra.mxu0 %v375
        %394 = vmatprep.subr.mxu0 0.0
        %395 = vmatpush1.msra.mxu0 %v376
        %396 = vmatprep.subr.mxu0 0.0
        %397 = vmatpush1.msra.mxu0 0.0
        %398 = vmatprep.subr.mxu0 0.0
        %399 = vmatpush1.msra.mxu0 0.0
        %400 = vmatprep.subr.mxu0 0.0
        %401 = vmatpush1.msra.mxu0 0.0
        %402 = vmatprep.subr.mxu0 0.0
        %403 = vmatpush1.msra.mxu0 0.0
        %404 = vmatprep.subr.mxu0 0.0
        %405 = vmatpush1.msra.mxu0 0.0
        %406 = vmatprep.subr.mxu0 0.0
        %407 = vmatpush1.msra.mxu0 0.0
        %408 = vmatprep.subr.mxu0 0.0
        %409 = vmatpush1.msra.mxu0 0.0
        %410 = vmatprep.subr.mxu0 0.0
        %411 = vmatpush1.msra.mxu0 0.0
        %412 = vmatprep.subr.mxu0 0.0
        %413 = vmatpush1.msra.mxu0 0.0
        %414 = vmatprep.subr.mxu0 0.0
        %415 = vmatpush1.msra.mxu0 0.0
        %416 = vmatprep.subr.mxu0 0.0
        %417 = vmatpush1.msra.mxu0 0.0
        %418 = vmatprep.subr.mxu0 0.0
        %419 = vmatpush1.msra.mxu0 0.0
        %420 = vmatprep.subr.mxu0 0.0
        %421 = vmatpush1.msra.mxu0 0.0
        %422 = vmatprep.subr.mxu0 0.0
        %423 = vmatpush1.msra.mxu0 0.0
        %424 = vmatprep.subr.mxu0 0.0
        %425 = vmatpush1.msra.mxu0 0.0
        %426 = vmatprep.subr.mxu0 0.0
        %427 = vmatpush1.msra.mxu0 0.0
        %428 = vmatprep.subr.mxu0 0.0
        %429 = vmatpush1.msra.mxu0 0.0
        %430 = vmatprep.subr.mxu0 0.0
        %431 = vmatpush1.msra.mxu0 0.0
        %432 = vmatprep.subr.mxu0 0.0
        %433 = vmatpush1.msra.mxu0 0.0
        %434 = vmatprep.subr.mxu0 0.0
        %435 = vmatpush1.msra.mxu0 0.0
        %436 = vmatprep.subr.mxu0 0.0
        %437 = vmatpush1.msra.mxu0 0.0
        %438 = vmatprep.subr.mxu0 0.0
        %439 = vmatpush1.msra.mxu0 0.0
        %440 = vmatprep.subr.mxu0 0.0
        %441 = vmatpush1.msra.mxu0 0.0
        %442 = vmatprep.subr.mxu0 0.0
        %443 = vmatpush1.msra.mxu0 0.0
        %444 = vmatprep.subr.mxu0 0.0
        %445 = vmatpush1.msra.mxu0 0.0
        %446 = vmatprep.subr.mxu0 0.0
        %447 = vmatpush1.msra.mxu0 0.0
        %448 = vmatprep.subr.mxu0 0.0
        %449 = vmatpush1.msra.mxu0 0.0
        %450 = vmatprep.subr.mxu0 0.0
        %451 = vmatpush1.msra.mxu0 0.0
        %452 = vmatprep.mubr.f32.mxu0 0.0
        %453 = vmatmul.mubr.f32.gmra.mrb[0].mxu0 %v386
        %v454 = vpop.f32.mrb[0].mxu0
        %v455 = vadd.f32 %v382, %v454
        %v456 = vpop.f32.mrb[0].mxu0
        %457 = vdwg.mxu0
        %v458 = vld [vmem:[%s4] sm:$0xff]
        %v459 = vld [vmem:[%s4 + $0x8] sm:$0xff]
        %v460 = vld [vmem:[%s4 + $0x10] sm:$0xff]
        %v461 = vld [vmem:[%s4 + $0x18] sm:$0xff]
        %v462 = vld [vmem:[%s5] sm:$0x1]
        %v464 = vlaneseq
        %v465 = vshrl.u32 %v464, 7
        %v466 = vsub.s32 0, %v465
        %v467 = vrot.slane %v462, %v466
        %v470 = vsel %vm384, %v455, 0
        %472 = vmatprep.subr.mxu0 0.0
        %473 = vmatpush1.msra.mxu0 %v458
        %474 = vmatprep.subr.mxu0 0.0
        %475 = vmatpush1.msra.mxu0 %v459
        %476 = vmatprep.subr.mxu0 0.0
        %477 = vmatpush1.msra.mxu0 %v460
        %478 = vmatprep.subr.mxu0 0.0
        %479 = vmatpush1.msra.mxu0 %v461
        %480 = vmatprep.subr.mxu0 0.0
        %481 = vmatpush1.msra.mxu0 0.0
        %482 = vmatprep.subr.mxu0 0.0
        %483 = vmatpush1.msra.mxu0 0.0
        %484 = vmatprep.subr.mxu0 0.0
        %485 = vmatpush1.msra.mxu0 0.0
        %486 = vmatprep.subr.mxu0 0.0
        %487 = vmatpush1.msra.mxu0 0.0
        %488 = vmatprep.subr.mxu0 0.0
        %489 = vmatpush1.msra.mxu0 0.0
        %490 = vmatprep.subr.mxu0 0.0
        %491 = vmatpush1.msra.mxu0 0.0
        %492 = vmatprep.subr.mxu0 0.0
        %493 = vmatpush1.msra.mxu0 0.0
        %494 = vmatprep.subr.mxu0 0.0
        %495 = vmatpush1.msra.mxu0 0.0
        %496 = vmatprep.subr.mxu0 0.0
        %497 = vmatpush1.msra.mxu0 0.0
        %498 = vmatprep.subr.mxu0 0.0
        %499 = vmatpush1.msra.mxu0 0.0
        %500 = vmatprep.subr.mxu0 0.0
        %501 = vmatpush1.msra.mxu0 0.0
        %502 = vmatprep.subr.mxu0 0.0
        %503 = vmatpush1.msra.mxu0 0.0
        %504 = vmatprep.subr.mxu0 0.0
        %505 = vmatpush1.msra.mxu0 0.0
        %506 = vmatprep.subr.mxu0 0.0
        %507 = vmatpush1.msra.mxu0 0.0
        %508 = vmatprep.subr.mxu0 0.0
        %509 = vmatpush1.msra.mxu0 0.0
        %510 = vmatprep.subr.mxu0 0.0
        %511 = vmatpush1.msra.mxu0 0.0
        %512 = vmatprep.subr.mxu0 0.0
        %513 = vmatpush1.msra.mxu0 0.0
        %514 = vmatprep.subr.mxu0 0.0
        %515 = vmatpush1.msra.mxu0 0.0
        %516 = vmatprep.subr.mxu0 0.0
        %517 = vmatpush1.msra.mxu0 0.0
        %518 = vmatprep.subr.mxu0 0.0
        %519 = vmatpush1.msra.mxu0 0.0
        %520 = vmatprep.subr.mxu0 0.0
        %521 = vmatpush1.msra.mxu0 0.0
        %522 = vmatprep.subr.mxu0 0.0
        %523 = vmatpush1.msra.mxu0 0.0
        %524 = vmatprep.subr.mxu0 0.0
        %525 = vmatpush1.msra.mxu0 0.0
        %526 = vmatprep.subr.mxu0 0.0
        %527 = vmatpush1.msra.mxu0 0.0
        %528 = vmatprep.subr.mxu0 0.0
        %529 = vmatpush1.msra.mxu0 0.0
        %530 = vmatprep.subr.mxu0 0.0
        %531 = vmatpush1.msra.mxu0 0.0
        %532 = vmatprep.subr.mxu0 0.0
        %533 = vmatpush1.msra.mxu0 0.0
        %534 = vmatprep.subr.mxu0 0.0
        %535 = vmatpush1.msra.mxu0 0.0
        %536 = vmatprep.mubr.f32.mxu0 0.0
        %537 = vmatmul.mubr.f32.gmra.mrb[0].mxu0 %v470
        %v538 = vpop.f32.mrb[0].mxu0
        %v539 = vadd.f32 %v467, %v538
        %v540 = vpop.f32.mrb[0].mxu0
        %541 = vdwg.mxu0
        %v542 = vmax.f32 %v539, 0.0
        %v543 = vld [vmem:[%s6] sm:$0xff]
        %v544 = vld [vmem:[%s6 + $0x8] sm:$0xff]
        %v545 = vld [vmem:[%s6 + $0x10] sm:$0xff]
        %v546 = vld [vmem:[%s6 + $0x18] sm:$0xff]
        %v547 = vld [vmem:[%s6 + $0x20] sm:$0xff]
        %v548 = vld [vmem:[%s6 + $0x28] sm:$0xff]
        %v549 = vld [vmem:[%s6 + $0x30] sm:$0xff]
        %v550 = vld [vmem:[%s6 + $0x38] sm:$0xff]
        %v551 = vld [vmem:[%s6 + $0x40] sm:$0xff]
        %v552 = vld [vmem:[%s6 + $0x48] sm:$0xff]
        %v553 = vld [vmem:[%s6 + $0x50] sm:$0xff]
        %v554 = vld [vmem:[%s6 + $0x58] sm:$0xff]
        %v555 = vld [vmem:[%s6 + $0x60] sm:$0xff]
        %v556 = vld [vmem:[%s6 + $0x68] sm:$0xff]
        %v557 = vld [vmem:[%s6 + $0x70] sm:$0xff]
        %v558 = vld [vmem:[%s6 + $0x78] sm:$0xff]
        %v559 = vld [vmem:[%s7] sm:$0x1]
        %v561 = vlaneseq
        %v562 = vshrl.u32 %v561, 7
        %v563 = vsub.s32 0, %v562
        %v564 = vrot.slane %v559, %v563
        %566 = vmatprep.subr.mxu0 0.0
        %567 = vmatpush1.msra.mxu0 %v543
        %568 = vmatprep.subr.mxu0 0.0
        %569 = vmatpush1.msra.mxu0 %v544
        %570 = vmatprep.subr.mxu0 0.0
        %571 = vmatpush1.msra.mxu0 %v545
        %572 = vmatprep.subr.mxu0 0.0
        %573 = vmatpush1.msra.mxu0 %v546
        %574 = vmatprep.subr.mxu0 0.0
        %575 = vmatpush1.msra.mxu0 %v547
        %576 = vmatprep.subr.mxu0 0.0
        %577 = vmatpush1.msra.mxu0 %v548
        %578 = vmatprep.subr.mxu0 0.0
        %579 = vmatpush1.msra.mxu0 %v549
        %580 = vmatprep.subr.mxu0 0.0
        %581 = vmatpush1.msra.mxu0 %v550
        %582 = vmatprep.subr.mxu0 0.0
        %583 = vmatpush1.msra.mxu0 %v551
        %584 = vmatprep.subr.mxu0 0.0
        %585 = vmatpush1.msra.mxu0 %v552
        %586 = vmatprep.subr.mxu0 0.0
        %587 = vmatpush1.msra.mxu0 %v553
        %588 = vmatprep.subr.mxu0 0.0
        %589 = vmatpush1.msra.mxu0 %v554
        %590 = vmatprep.subr.mxu0 0.0
        %591 = vmatpush1.msra.mxu0 %v555
        %592 = vmatprep.subr.mxu0 0.0
        %593 = vmatpush1.msra.mxu0 %v556
        %594 = vmatprep.subr.mxu0 0.0
        %595 = vmatpush1.msra.mxu0 %v557
        %596 = vmatprep.subr.mxu0 0.0
        %597 = vmatpush1.msra.mxu0 %v558
        %598 = vmatprep.subr.mxu0 0.0
        %599 = vmatpush1.msra.mxu0 0.0
        %600 = vmatprep.subr.mxu0 0.0
        %601 = vmatpush1.msra.mxu0 0.0
        %602 = vmatprep.subr.mxu0 0.0
        %603 = vmatpush1.msra.mxu0 0.0
        %604 = vmatprep.subr.mxu0 0.0
        %605 = vmatpush1.msra.mxu0 0.0
        %606 = vmatprep.subr.mxu0 0.0
        %607 = vmatpush1.msra.mxu0 0.0
        %608 = vmatprep.subr.mxu0 0.0
        %609 = vmatpush1.msra.mxu0 0.0
        %610 = vmatprep.subr.mxu0 0.0
        %611 = vmatpush1.msra.mxu0 0.0
        %612 = vmatprep.subr.mxu0 0.0
        %613 = vmatpush1.msra.mxu0 0.0
        %614 = vmatprep.subr.mxu0 0.0
        %615 = vmatpush1.msra.mxu0 0.0
        %616 = vmatprep.subr.mxu0 0.0
        %617 = vmatpush1.msra.mxu0 0.0
        %618 = vmatprep.subr.mxu0 0.0
        %619 = vmatpush1.msra.mxu0 0.0
        %620 = vmatprep.subr.mxu0 0.0
        %621 = vmatpush1.msra.mxu0 0.0
        %622 = vmatprep.subr.mxu0 0.0
        %623 = vmatpush1.msra.mxu0 0.0
        %624 = vmatprep.subr.mxu0 0.0
        %625 = vmatpush1.msra.mxu0 0.0
        %626 = vmatprep.subr.mxu0 0.0
        %627 = vmatpush1.msra.mxu0 0.0
        %628 = vmatprep.subr.mxu0 0.0
        %629 = vmatpush1.msra.mxu0 0.0
        %630 = vmatprep.mubr.f32.mxu0 0.0
        %631 = vmatmul.mubr.f32.gmra.mrb[0].mxu0 %v542
        %v632 = vpop.f32.mrb[0].mxu0
        %v633 = vadd.f32 %v564, %v632
        %v634 = vpop.f32.mrb[0].mxu0
        %635 = vdwg.mxu0
        %v636 = vadd.f32 %v455, %v633
        %v637 = vld [vmem:[%s371] sm:$0xff]
        %v638 = vadd.f32 %v636, %v637
        %v639 = vsel %vm384, %v638, 0.0
        %640 = vadd.xlane.f32.xlu0 %v639
        %v641 = vpop.xlane.xlu0 %640
        %v642 = vrcp.pop 32.0
        %v643 = vmul.f32 %v641, %v642
        %v644 = vmul.f32 %v638, %v638
        %v645 = vsel %vm384, %v644, 0.0
        %646 = vadd.xlane.f32.xlu0 %v645
        %v647 = vpop.xlane.xlu0 %646
        %v648 = vmul.f32 %v647, %v642
        %v649 = vmul.f32 %v643, %v643
        %v650 = vsub.f32 %v648, %v649
        %v651 = vmax.f32 %v650, 0.0
        %v652 = vsub.f32 %v638, %v643
        %v653 = vadd.f32 %v651, 1e-12
        %v654 = vrsqrt.pop %v653
        %v655 = vmul.f32 %v652, %v654
        %v656 = vld [vmem:[%s8] sm:$0x1]
        %v658 = vlaneseq
        %v659 = vshrl.u32 %v658, 7
        %v660 = vsub.s32 0, %v659
        %v661 = vrot.slane %v656, %v660
        %v663 = vmul.f32 %v655, %v661
        %v664 = vld [vmem:[%s9] sm:$0x1]
        %v666 = vlaneseq
        %v667 = vshrl.u32 %v666, 7
        %v668 = vsub.s32 0, %v667
        %v669 = vrot.slane %v664, %v668
        %v671 = vadd.f32 %v663, %v669
        %672 = vst.msk [vmem:[%s363] sm:$0xff] %vm384, %v671
        %s673 = sand.u32 %s252, 1
        %s674 = scalar_lea.sflag [#allocation3], %s673
        %s675 = sand.u32 %s252, 1
        %s676 = smul.addr %s675, 8
        %s677 = scalar_lea.vmem [#allocation2], %s676
        // Predicated region
        $region61: #{tpu_custom_call.1} parent=59 // pred_check
          %p678 = pneg %p262
        $region62: #{tpu_custom_call.1} parent=59 // pred_check_branch
          %680 = sbr.rel (%p678) target = $region64
        $region63: #{tpu_custom_call.1} parent=59 // pred_region
          %s682 = ssub.s32 128, 128
          %683 = vsyncadd %s674, %s682
          %s684 = smul.addr %s24, 128
          %s685 = scalar_lea.hbm %s10, %s684
          %s687 = sshll.u32 %s677, 4
          %s688 = int_to_ptr.vmem [resolvable:$true] %s687
          %690 = dma.vmem_to_hbm [thread:$0]  %s688, 128, %s685, %s674
        $region64: #{tpu_custom_call.1} parent=59 // pred_fallthru
          _
      $region60: #{tpu_custom_call.1} parent=5 // pred_fallthru
        _
      %p691 = scmp.le.s32.totalorder 2, %s19
      // Predicated region
      $region65: #{tpu_custom_call.1} parent=5 // pred_check
        %p692 = pneg %p691
      $region66: #{tpu_custom_call.1} parent=5 // pred_check_branch
        %694 = sbr.rel (%p692) target = $region68
      $region67: #{tpu_custom_call.1} parent=5 // pred_region
        %s695 = ssub.s32 %s19, 2
        // Predicated region
        $region69: #{tpu_custom_call.1} parent=67 // pred_check
          %p696 = pneg %p268
        $region70: #{tpu_custom_call.1} parent=67 // pred_check_branch
          %698 = sbr.rel (%p696) target = $region72
        $region71: #{tpu_custom_call.1} parent=67 // pred_region
          %s699 = sand.u32 %s253, 1
          %s700 = scalar_lea.sflag [#allocation3], %s699
          %s701 = sand.u32 %s253, 1
          %s702 = smul.addr %s701, 8
          %s703 = scalar_lea.vmem [#allocation2], %s702
          %704 = dma.done %s700, 128
        $region72: #{tpu_custom_call.1} parent=67 // pred_fallthru
          _
      $region68: #{tpu_custom_call.1} parent=5 // pred_fallthru
        _
    $region6: #{tpu_custom_call.1} parent=1 // loop_footer
      %s23 = sadd.s32 1, %s19
    $region7: #{tpu_custom_call.1} parent=1 // loop_footer_branch
      %18 = sbr.rel target = $region3
    $region8: #{tpu_custom_call.1} parent=1 // loop_exit
      _
    %705 = vsyncpa [#allocation3], 1
    %s706 = scalar_lea.sflag [#allocation3], 1
    %707 = vsyncpa %s706, 1

</llo_original>
